<compile_context>
chip_gen: v7x
topology: tpu7x:2x2x1
jax: 0.10.0
libtpu: 0.0.40
codegen_flags: <defaults>
</compile_context>

<pallas_src>
from functools import partial

import jax
import jax.numpy as jnp
from jax.experimental import pallas as pl
from jax.experimental.pallas import tpu as pltpu


def _round_up(v, m):
    return (v + m - 1) // m * m


def _pad2(a, rows, cols):
    pr, pc = rows - a.shape[0], cols - a.shape[1]
    if pr == 0 and pc == 0:
        return a
    return jnp.pad(a, ((0, pr), (0, pc)))


def _pick_tile(dim, want):
    """Largest multiple of 128 that divides `dim` (a multiple of 128) and is
    <= want (floored at 128)."""
    t = max(min(dim, want) // 128 * 128, 128)
    while dim % t:
        t -= 128
    return t


# ---------------------------------------------------------------------------
# Kernel 1: feature transform  T = X @ W   (small: O(N * F * H)), bf16 MXU
#           feeds, f32 accumulator, k-grid over the feature axis.
# ---------------------------------------------------------------------------
def _feature_transform_kernel(x_ref, w_ref, t_ref, acc_ref):
    k = pl.program_id(1)

    @pl.when(k == 0)
    def _():
        acc_ref[...] = jnp.zeros_like(acc_ref)

    acc_ref[...] += jnp.dot(x_ref[...], w_ref[...],
                            preferred_element_type=jnp.float32)

    @pl.when(k == pl.num_programs(1) - 1)
    def _():
        t_ref[...] = acc_ref[...].astype(t_ref.dtype)


def _feature_transform(x, w, *, tile_m, tile_f, out_dtype, vmem_limit_bytes):
    n_pad, f_pad = x.shape
    h_pad = w.shape[1]
    kf = f_pad // tile_f

    x_spec = pl.BlockSpec((tile_m, tile_f), lambda i, k: (i, k))
    if kf == 1:
        # constant index map -> single-buffer the resident weight block
        w_spec = pl.BlockSpec((tile_f, h_pad), lambda i, k: (0, 0),
                              pipeline_mode=pl.Buffered(1))
    else:
        w_spec = pl.BlockSpec((tile_f, h_pad), lambda i, k: (k, 0))

    cost = pl.CostEstimate(
        flops=2 * n_pad * f_pad * h_pad,
        transcendentals=0,
        bytes_accessed=int(x.size * x.dtype.itemsize
                           + w.size * w.dtype.itemsize
                           + n_pad * h_pad * jnp.dtype(out_dtype).itemsize),
    )
    return pl.pallas_call(
        _feature_transform_kernel,
        out_shape=jax.ShapeDtypeStruct((n_pad, h_pad), out_dtype),
        grid_spec=pltpu.PrefetchScalarGridSpec(
            num_scalar_prefetch=0,
            grid=(n_pad // tile_m, kf),
            in_specs=[x_spec, w_spec],
            out_specs=pl.BlockSpec((tile_m, h_pad), lambda i, k: (i, 0)),
            scratch_shapes=[pltpu.VMEM((tile_m, h_pad), jnp.float32)]),
        compiler_params=pltpu.CompilerParams(
            dimension_semantics=("parallel", "arbitrary"),
            vmem_limit_bytes=vmem_limit_bytes),
        cost_estimate=cost,
    )(x, w)


# ---------------------------------------------------------------------------
# Kernel 2: adjacency propagation  OUT = epilogue(A @ T + b)
#   A streamed in (tile_m, tile_k) blocks in its native dtype and cast to the
#   MXU dtype in-kernel; T resident (single-buffered) or k-streamed; f32
#   accumulator scratch; relu epilogue (layer 1) or fused classifier (layer 2).
# ---------------------------------------------------------------------------
def _propagate_relu_kernel(a_ref, t_ref, b_ref, h_ref, acc_ref, *, stream_t):
    k = pl.program_id(1)
    tk = a_ref.shape[1]

    @pl.when(k == 0)
    def _():
        acc_ref[...] = jnp.zeros_like(acc_ref)

    a_blk = a_ref[...].astype(t_ref.dtype)          # VPU cast (no-op if bf16)
    if stream_t:
        t_blk = t_ref[...]
    else:
        off = pl.multiple_of(k * tk, tk)
        t_blk = t_ref[pl.ds(off, tk), :]
    acc_ref[...] += jnp.dot(a_blk, t_blk, preferred_element_type=jnp.float32)

    @pl.when(k == pl.num_programs(1) - 1)
    def _():
        # bias broadcast + relu only once per row-tile (not per k-step)
        h_ref[...] = jnp.maximum(acc_ref[...] + b_ref[...], 0.0).astype(h_ref.dtype)


def _propagate_classify_kernel(a_ref, t_ref, b_ref, wc_ref, bc_ref,
                               z_ref, y_ref, acc_ref, *, stream_t):
    k = pl.program_id(1)
    tk = a_ref.shape[1]

    @pl.when(k == 0)
    def _():
        acc_ref[...] = jnp.zeros_like(acc_ref)

    a_blk = a_ref[...].astype(t_ref.dtype)
    if stream_t:
        t_blk = t_ref[...]
    else:
        off = pl.multiple_of(k * tk, tk)
        t_blk = t_ref[pl.ds(off, tk), :]
    acc_ref[...] += jnp.dot(a_blk, t_blk, preferred_element_type=jnp.float32)

    @pl.when(k == pl.num_programs(1) - 1)
    def _():
        z = acc_ref[...] + b_ref[...]
        z_ref[...] = z.astype(z_ref.dtype)
        # classifier Linear(hidden, 1) as a VPU reduction: avoids a lane-sparse
        # [*, 1] MXU dot on the critical path.
        y = jnp.sum(z * wc_ref[...], axis=-1, keepdims=True) + bc_ref[...]
        y_ref[...] = y.astype(y_ref.dtype)


def _propagate(a, t, b, *, tile_m, tile_k, out_dtype, stream_t,
               classifier=None, vmem_limit_bytes=None):
    n_pad = a.shape[0]
    h_pad = t.shape[1]
    grid = (n_pad // tile_m, n_pad // tile_k)

    a_spec = pl.BlockSpec((tile_m, tile_k), lambda i, k: (i, k))
    if stream_t:
        t_spec = pl.BlockSpec((tile_k, h_pad), lambda i, k: (k, 0))
        t_reads = (n_pad // tile_m) * n_pad * h_pad       # re-read per row tile
    else:
        t_spec = pl.BlockSpec((n_pad, h_pad), lambda i, k: (0, 0),
                              pipeline_mode=pl.Buffered(1))
        t_reads = n_pad * h_pad
    b_spec = pl.BlockSpec((1, h_pad), lambda i, k: (0, 0),
                          pipeline_mode=pl.Buffered(1))
    o_spec = pl.BlockSpec((tile_m, h_pad), lambda i, k: (i, 0))   # lane-dense

    base_bytes = int(a.size * a.dtype.itemsize
                     + t_reads * t.dtype.itemsize
                     + n_pad * h_pad * jnp.dtype(out_dtype).itemsize)
    compiler_params = pltpu.CompilerParams(
        dimension_semantics=("parallel", "arbitrary"),
        vmem_limit_bytes=vmem_limit_bytes)
    scratch = [pltpu.VMEM((tile_m, h_pad), jnp.float32)]

    if classifier is None:
        return pl.pallas_call(
            partial(_propagate_relu_kernel, stream_t=stream_t),
            out_shape=jax.ShapeDtypeStruct((n_pad, h_pad), out_dtype),
            grid_spec=pltpu.PrefetchScalarGridSpec(
                num_scalar_prefetch=0, grid=grid,
                in_specs=[a_spec, t_spec, b_spec],
                out_specs=o_spec,
                scratch_shapes=scratch),
            compiler_params=compiler_params,
            cost_estimate=pl.CostEstimate(
                flops=2 * n_pad * n_pad * h_pad,
                transcendentals=0,
                bytes_accessed=base_bytes),
        )(a, t, b)

    wc_row, bc = classifier
    wc_spec = pl.BlockSpec((1, h_pad), lambda i, k: (0, 0),
                           pipeline_mode=pl.Buffered(1))
    bc_spec = pl.BlockSpec((1, 1), lambda i, k: (0, 0),
                           pipeline_mode=pl.Buffered(1))
    y_spec = pl.BlockSpec((tile_m, 1), lambda i, k: (i, 0))
    return pl.pallas_call(
        partial(_propagate_classify_kernel, stream_t=stream_t),
        out_shape=(jax.ShapeDtypeStruct((n_pad, h_pad), out_dtype),
                   jax.ShapeDtypeStruct((n_pad, 1), jnp.float32)),
        grid_spec=pltpu.PrefetchScalarGridSpec(
            num_scalar_prefetch=0, grid=grid,
            in_specs=[a_spec, t_spec, b_spec, wc_spec, bc_spec],
            out_specs=(o_spec, y_spec),
            scratch_shapes=scratch),
        compiler_params=compiler_params,
        cost_estimate=pl.CostEstimate(
            flops=2 * n_pad * n_pad * h_pad + 2 * n_pad * h_pad,
            transcendentals=0,
            bytes_accessed=base_bytes + 4 * n_pad),
    )(a, t, b, wc_row, bc)


# ---------------------------------------------------------------------------
# Forward wrapper (matches WrappedGNN.forward -> (z, y))
# ---------------------------------------------------------------------------
def wrapped_gnn_forward(a_hat, x, params, *, tile_m=256, tile_k=512,
                        compute_dtype=jnp.bfloat16,
                        t_budget_bytes=36 * 1024 * 1024,
                        vmem_limit_bytes=None):
    """WrappedGNN (GCN body) forward.

    Only A_hat is O(N^2).  It is streamed in (tile_m, tile_k) blocks in its
    native dtype (no wrapper-side cast pre-pass when N is already tile
    aligned) and cast to bf16 on the VPU inside the propagate kernels.
    Callers that already hold A_hat in bf16 get the minimum 2 bytes/elem
    HBM traffic with zero pre-processing.
    """
    n, f = x.shape
    hidden = params["w2"].shape[1]

    f_pad = _round_up(f, 128)
    h_pad = _round_up(hidden, 128)
    n_pad = _round_up(n, 128)

    tm = _pick_tile(n_pad, tile_m)
    tk = _pick_tile(n_pad, tile_k)

    # VMEM-budgeted plan for T = X @ W (per-core budget; v7x has 64 MiB/TC).
    stream_t = n_pad * h_pad * 2 > t_budget_bytes
    if stream_t:
        # amortize the extra T re-reads over bigger row tiles
        tm = _pick_tile(n_pad, max(tm, 512))
    elif n_pad // tm < 2 and tm > 128:
        tm //= 2            # keep >= 2 row tiles so both v7x cores get work

    if vmem_limit_bytes is None:
        a_item = jnp.dtype(a_hat.dtype).itemsize if a_hat.shape == (n_pad, n_pad) \
            else jnp.dtype(compute_dtype).itemsize
        t_vmem = (2 * tk * h_pad * 2) if stream_t else (n_pad * h_pad * 2)
        need = (2 * tm * tk * a_item          # double-buffered A tiles
                + t_vmem                      # T (resident single-buf / streamed)
                + 2 * tm * h_pad * 4          # output tiles (f32 worst case)
                + tm * h_pad * 4              # f32 accumulator scratch
                + 2 * tm * 4                  # y tiles
                + 8 * h_pad * 4)              # biases / classifier row
        vmem_limit_bytes = min(max(need + (4 << 20), 16 << 20), 100 << 20)

    # A: avoid any full-HBM pre-pass when already padded; if padding is
    # required anyway, fuse the bf16 cast into that single pass.
    if a_hat.shape == (n_pad, n_pad):
        a_in = a_hat
    else:
        a_in = _pad2(a_hat, n_pad, n_pad).astype(compute_dtype)

    # Zero padding is exact: padded hidden columns stay 0 through both layers
    # (weights/biases padded with zeros), padded node rows never contaminate
    # real rows (A's padded rows/cols are zero); padding is sliced off below.
    x_p = _pad2(x, n_pad, f_pad).astype(compute_dtype)            # bf16 MXU feed
    w1_p = _pad2(params["w1"], f_pad, h_pad).astype(compute_dtype)
    b1_p = _pad2(params["b1"].reshape(1, -1), 1, h_pad).astype(jnp.float32)
    w2_p = _pad2(params["w2"], h_pad, h_pad).astype(compute_dtype)
    b2_p = _pad2(params["b2"].reshape(1, -1), 1, h_pad).astype(jnp.float32)
    wc_p = _pad2(params["wc"].reshape(1, -1), 1, h_pad).astype(jnp.float32)
    bc_p = params["bc"].reshape(1, 1).astype(jnp.float32)

    tf1 = _pick_tile(f_pad, 512)
    tf2 = _pick_tile(h_pad, 512)

    # layer 1: h1 = relu(A @ (X @ W1) + b1)
    t1 = _feature_transform(x_p, w1_p, tile_m=tm, tile_f=tf1,
                            out_dtype=compute_dtype,
                            vmem_limit_bytes=vmem_limit_bytes)
    h1 = _propagate(a_in, t1, b1_p, tile_m=tm, tile_k=tk,
                    out_dtype=compute_dtype, stream_t=stream_t,
                    vmem_limit_bytes=vmem_limit_bytes)

    # layer 2 + fused classifier: z = A @ (h1 @ W2) + b2 ; y = z @ Wc + bc
    t2 = _feature_transform(h1, w2_p, tile_m=tm, tile_f=tf2,
                            out_dtype=compute_dtype,
                            vmem_limit_bytes=vmem_limit_bytes)
    z_pad, y_pad = _propagate(a_in, t2, b2_p, tile_m=tm, tile_k=tk,
                              out_dtype=jnp.float32, stream_t=stream_t,
                              classifier=(wc_p, bc_p),
                              vmem_limit_bytes=vmem_limit_bytes)

    return z_pad[:n, :hidden], y_pad[:n, :]


# ---------------------------------------------------------------------------
# Reference / test harness
# ---------------------------------------------------------------------------
def _reference_forward(a_hat, x, params):
    h1 = jnp.maximum(a_hat @ (x @ params["w1"]) + params["b1"], 0.0)
    z = a_hat @ (h1 @ params["w2"]) + params["b2"]
    y = z @ params["wc"] + params["bc"]
    return z, y


def _make_params(key, input_dim, hidden_dim):
    k1, k2, k3, k4, k5, k6 = jax.random.split(key, 6)
    s1 = 1.0 / jnp.sqrt(jnp.float32(input_dim))
    s2 = 1.0 / jnp.sqrt(jnp.float32(hidden_dim))
    return {
        "w1": jax.random.normal(k1, (input_dim, hidden_dim), jnp.float32) * s1,
        "b1": jax.random.normal(k4, (1, hidden_dim), jnp.float32) * 0.1,
        "w2": jax.random.normal(k2, (hidden_dim, hidden_dim), jnp.float32) * s2,
        "b2": jax.random.normal(k5, (1, hidden_dim), jnp.float32) * 0.1,
        "wc": jax.random.normal(k3, (hidden_dim, 1), jnp.float32) * s2,
        "bc": jax.random.normal(k6, (1, 1), jnp.float32) * 0.1,
    }


def _make_graph(key, n):
    """Dense random graph -> symmetrically normalized adjacency with self-loops
    (normalization computed in f32 before any lower-precision use)."""
    a = (jax.random.uniform(key, (n, n)) < 0.3).astype(jnp.float32)
    a = jnp.maximum(a, a.T)                                      # symmetrize
    a = jnp.minimum(a + jnp.eye(n, dtype=jnp.float32), 1.0)      # self loops
    deg = a.sum(axis=1)
    d_inv_sqrt = 1.0 / jnp.sqrt(deg)
    return a * d_inv_sqrt[:, None] * d_inv_sqrt[None, :]


if __name__ == "__main__":
    # Small, but large enough to exercise a multi-tile row grid.
    N, INPUT_DIM, HIDDEN_DIM = 256, 16, 32

    key = jax.random.PRNGKey(0)
    k_graph, k_feat, k_params = jax.random.split(key, 3)

    a_hat = _make_graph(k_graph, N)                                # [N, N] f32
    x = jax.random.normal(k_feat, (N, INPUT_DIM), jnp.float32)     # [N, F]
    params = _make_params(k_params, INPUT_DIM, HIDDEN_DIM)

    z, y = jax.jit(wrapped_gnn_forward)(a_hat, x, params)
    jax.block_until_ready((z, y))

    z_ref, y_ref = _reference_forward(a_hat, x, params)

    def max_rel_err(got, ref):
        return float(jnp.max(jnp.abs(got - ref)) / (jnp.max(jnp.abs(ref)) + 1e-8))

    assert z.shape == (N, HIDDEN_DIM) and y.shape == (N, 1)
    # bf16 A / X / weights / activations with f32 accumulation -> bf16 tolerance.
    assert max_rel_err(z, z_ref) < 4e-2, max_rel_err(z, z_ref)
    assert max_rel_err(y, y_ref) < 4e-2, max_rel_err(y, y_ref)

    print("KERNEL_OK")
</pallas_src>

<mosaic_0001>
module attributes {stable_mosaic.version = 11 : i64} {
  func.func @_propagate_classify_kernel(%arg0: i32, %arg1: i32, %arg2: memref<128x256xf32, #tpu.memory_space<vmem>>, %arg3: memref<256x128xbf16, #tpu.memory_space<vmem>>, %arg4: memref<1x128xf32, #tpu.memory_space<vmem>>, %arg5: memref<1x128xf32, #tpu.memory_space<vmem>>, %arg6: memref<1x1xf32, #tpu.memory_space<vmem>>, %arg7: memref<128x128xf32, #tpu.memory_space<vmem>>, %arg8: memref<128x1xf32, #tpu.memory_space<vmem>>, %arg9: memref<128x128xf32, #tpu.memory_space<vmem>>) attributes {dimension_semantics = [#tpu.dimension_semantics<parallel>, #tpu.dimension_semantics<arbitrary>], iteration_bounds = array<i64: 2, 1>, scalar_prefetch = 0 : i64, scratch_operands = 1 : i64, tpu.core_type = #tpu.core_type<tc>, window_params = [{transform_indices = @transform_0, window_bounds = array<i64: 128, 256>}, {pipeline_mode = #tpu.pipeline_mode<synchronous>, transform_indices = @transform_1, window_bounds = array<i64: 256, 128>}, {pipeline_mode = #tpu.pipeline_mode<synchronous>, transform_indices = @transform_2, window_bounds = array<i64: 1, 128>}, {pipeline_mode = #tpu.pipeline_mode<synchronous>, transform_indices = @transform_3, window_bounds = array<i64: 1, 128>}, {pipeline_mode = #tpu.pipeline_mode<synchronous>, transform_indices = @transform_4, window_bounds = array<i64: 1, 1>}, {transform_indices = @transform_5, window_bounds = array<i64: 128, 128>}, {transform_indices = @transform_6, window_bounds = array<i64: 128, 1>}]} {
    %c0_i32 = arith.constant 0 : i32
    %0 = arith.cmpi eq, %arg1, %c0_i32 : i32
    %1 = arith.extui %0 : i1 to i32
    %c0_i32_0 = arith.constant 0 : i32
    %2 = arith.cmpi ne, %1, %c0_i32_0 : i32
    scf.if %2 {
      %cst_9 = arith.constant 0.000000e+00 : f32
      %16 = vector.broadcast %cst_9 : f32 to vector<128x128xf32>
      %c0_10 = arith.constant 0 : index
      %c0_11 = arith.constant 0 : index
      %17 = vector.load %arg9[%c0_10, %c0_11] : memref<128x128xf32, #tpu.memory_space<vmem>>, vector<128x128xf32>
      tpu.vector_store %arg9[%c0_10, %c0_11], %16 {strides = array<i32>} : memref<128x128xf32, #tpu.memory_space<vmem>>, vector<128x128xf32>,
    } else {
    }
    %c0 = arith.constant 0 : index
    %c0_1 = arith.constant 0 : index
    %3 = vector.load %arg2[%c0, %c0_1] : memref<128x256xf32, #tpu.memory_space<vmem>>, vector<128x256xf32>
    %4 = arith.truncf %3 : vector<128x256xf32> to vector<128x256xbf16>
    %c256_i32 = arith.constant 256 : i32
    %5 = arith.muli %arg1, %c256_i32 : i32
    %6 = tpu.assume_multiple %5, 256 : i32
    %7 = arith.index_cast %6 : i32 to index
    %c0_2 = arith.constant 0 : index
    %8 = vector.load %arg3[%7, %c0_2] : memref<256x128xbf16, #tpu.memory_space<vmem>>, vector<256x128xbf16>
    %c0_3 = arith.constant 0 : index
    %c0_4 = arith.constant 0 : index
    %9 = vector.load %arg9[%c0_3, %c0_4] : memref<128x128xf32, #tpu.memory_space<vmem>>, vector<128x128xf32>
    %cst = arith.constant dense<0.000000e+00> : vector<128x128xf32>
    %10 = tpu.matmul %4, %8, %cst {dimension_numbers = #tpu.dot_dimension_numbers<[1], [0], [0], [1], [0, 0, 1, 1], [], []>} : vector<128x256xbf16>, vector<256x128xbf16>, vector<128x128xf32> -> vector<128x128xf32>
    %11 = arith.addf %9, %10 : vector<128x128xf32>
    %c0_5 = arith.constant 0 : index
    %c0_6 = arith.constant 0 : index
    %12 = vector.load %arg9[%c0_5, %c0_6] : memref<128x128xf32, #tpu.memory_space<vmem>>, vector<128x128xf32>
    tpu.vector_store %arg9[%c0_5, %c0_6], %11 {strides = array<i32>} : memref<128x128xf32, #tpu.memory_space<vmem>>, vector<128x128xf32>,
    %c0_i32_7 = arith.constant 0 : i32
    %13 = arith.cmpi eq, %arg1, %c0_i32_7 : i32
    %14 = arith.extui %13 : i1 to i32
    %c0_i32_8 = arith.constant 0 : i32
    %15 = arith.cmpi ne, %14, %c0_i32_8 : i32
    scf.if %15 {
      %c0_9 = arith.constant 0 : index
      %c0_10 = arith.constant 0 : index
      %16 = vector.load %arg9[%c0_9, %c0_10] : memref<128x128xf32, #tpu.memory_space<vmem>>, vector<128x128xf32>
      %c0_11 = arith.constant 0 : index
      %c0_12 = arith.constant 0 : index
      %17 = vector.load %arg4[%c0_11, %c0_12] : memref<1x128xf32, #tpu.memory_space<vmem>>, vector<1x128xf32>
      %18 = vector.broadcast %17 : vector<1x128xf32> to vector<128x128xf32>
      %19 = arith.addf %16, %18 : vector<128x128xf32>
      %c0_13 = arith.constant 0 : index
      %c0_14 = arith.constant 0 : index
      %20 = vector.load %arg7[%c0_13, %c0_14] : memref<128x128xf32, #tpu.memory_space<vmem>>, vector<128x128xf32>
      tpu.vector_store %arg7[%c0_13, %c0_14], %19 {strides = array<i32>} : memref<128x128xf32, #tpu.memory_space<vmem>>, vector<128x128xf32>,
      %c0_15 = arith.constant 0 : index
      %c0_16 = arith.constant 0 : index
      %21 = vector.load %arg5[%c0_15, %c0_16] : memref<1x128xf32, #tpu.memory_space<vmem>>, vector<1x128xf32>
      %22 = vector.broadcast %21 : vector<1x128xf32> to vector<128x128xf32>
      %23 = arith.mulf %19, %22 : vector<128x128xf32>
      %cst_17 = arith.constant dense<0.000000e+00> : vector<128xf32>
      %24 = vector.multi_reduction <add>, %23, %cst_17 [1] : vector<128x128xf32> to vector<128xf32>
      %25 = vector.shape_cast %24 : vector<128xf32> to vector<128x1xf32>
      %c0_18 = arith.constant 0 : index
      %c0_19 = arith.constant 0 : index
      %26 = vector.load %arg6[%c0_18, %c0_19] : memref<1x1xf32, #tpu.memory_space<vmem>>, vector<1x1xf32>
      %27 = vector.broadcast %26 : vector<1x1xf32> to vector<128x1xf32>
      %28 = arith.addf %25, %27 : vector<128x1xf32>
      %c0_20 = arith.constant 0 : index
      %c0_21 = arith.constant 0 : index
      %29 = vector.load %arg8[%c0_20, %c0_21] : memref<128x1xf32, #tpu.memory_space<vmem>>, vector<128x1xf32>
      tpu.vector_store %arg8[%c0_20, %c0_21], %28 {strides = array<i32>} : memref<128x1xf32, #tpu.memory_space<vmem>>, vector<128x1xf32>,
    } else {
    }
    return
  }
  func.func @transform_0(%arg0: i32, %arg1: i32) -> (i32, i32) {
    %c0_i32 = arith.constant 0 : i32
    return %arg0, %arg1 : i32, i32
  }
  func.func @transform_1(%arg0: i32, %arg1: i32) -> (i32, i32) {
    %c0_i32 = arith.constant 0 : i32
    %c0_i32_0 = arith.constant 0 : i32
    %c0_i32_1 = arith.constant 0 : i32
    return %c0_i32, %c0_i32_0 : i32, i32
  }
  func.func @transform_2(%arg0: i32, %arg1: i32) -> (i32, i32) {
    %c0_i32 = arith.constant 0 : i32
    %c0_i32_0 = arith.constant 0 : i32
    %c0_i32_1 = arith.constant 0 : i32
    return %c0_i32, %c0_i32_0 : i32, i32
  }
  func.func @transform_3(%arg0: i32, %arg1: i32) -> (i32, i32) {
    %c0_i32 = arith.constant 0 : i32
    %c0_i32_0 = arith.constant 0 : i32
    %c0_i32_1 = arith.constant 0 : i32
    return %c0_i32, %c0_i32_0 : i32, i32
  }
  func.func @transform_4(%arg0: i32, %arg1: i32) -> (i32, i32) {
    %c0_i32 = arith.constant 0 : i32
    %c0_i32_0 = arith.constant 0 : i32
    %c0_i32_1 = arith.constant 0 : i32
    return %c0_i32, %c0_i32_0 : i32, i32
  }
  func.func @transform_5(%arg0: i32, %arg1: i32) -> (i32, i32) {
    %c0_i32 = arith.constant 0 : i32
    %c0_i32_0 = arith.constant 0 : i32
    return %arg0, %c0_i32 : i32, i32
  }
  func.func @transform_6(%arg0: i32, %arg1: i32) -> (i32, i32) {
    %c0_i32 = arith.constant 0 : i32
    %c0_i32_0 = arith.constant 0 : i32
    return %arg0, %c0_i32 : i32, i32
  }
}

module attributes {stable_mosaic.version = 11 : i64} {
  func.func @_feature_transform_kernel(%arg0: i32, %arg1: i32, %arg2: memref<128x128xbf16, #tpu.memory_space<vmem>>, %arg3: memref<128x128xbf16, #tpu.memory_space<vmem>>, %arg4: memref<128x128xbf16, #tpu.memory_space<vmem>>, %arg5: memref<128x128xf32, #tpu.memory_space<vmem>>) attributes {dimension_semantics = [#tpu.dimension_semantics<parallel>, #tpu.dimension_semantics<arbitrary>], iteration_bounds = array<i64: 2, 1>, scalar_prefetch = 0 : i64, scratch_operands = 1 : i64, tpu.core_type = #tpu.core_type<tc>, window_params = [{transform_indices = @transform_0, window_bounds = array<i64: 128, 128>}, {pipeline_mode = #tpu.pipeline_mode<synchronous>, transform_indices = @transform_1, window_bounds = array<i64: 128, 128>}, {transform_indices = @transform_2, window_bounds = array<i64: 128, 128>}]} {
    %c0_i32 = arith.constant 0 : i32
    %0 = arith.cmpi eq, %arg1, %c0_i32 : i32
    %1 = arith.extui %0 : i1 to i32
    %c0_i32_0 = arith.constant 0 : i32
    %2 = arith.cmpi ne, %1, %c0_i32_0 : i32
    scf.if %2 {
      %cst_10 = arith.constant 0.000000e+00 : f32
      %12 = vector.broadcast %cst_10 : f32 to vector<128x128xf32>
      %c0_11 = arith.constant 0 : index
      %c0_12 = arith.constant 0 : index
      %13 = vector.load %arg5[%c0_11, %c0_12] : memref<128x128xf32, #tpu.memory_space<vmem>>, vector<128x128xf32>
      tpu.vector_store %arg5[%c0_11, %c0_12], %12 {strides = array<i32>} : memref<128x128xf32, #tpu.memory_space<vmem>>, vector<128x128xf32>,
    } else {
    }
    %c0 = arith.constant 0 : index
    %c0_1 = arith.constant 0 : index
    %3 = vector.load %arg5[%c0, %c0_1] : memref<128x128xf32, #tpu.memory_space<vmem>>, vector<128x128xf32>
    %c0_2 = arith.constant 0 : index
    %c0_3 = arith.constant 0 : index
    %4 = vector.load %arg2[%c0_2, %c0_3] : memref<128x128xbf16, #tpu.memory_space<vmem>>, vector<128x128xbf16>
    %c0_4 = arith.constant 0 : index
    %c0_5 = arith.constant 0 : index
    %5 = vector.load %arg3[%c0_4, %c0_5] : memref<128x128xbf16, #tpu.memory_space<vmem>>, vector<128x128xbf16>
    %cst = arith.constant dense<0.000000e+00> : vector<128x128xf32>
    %6 = tpu.matmul %4, %5, %cst {dimension_numbers = #tpu.dot_dimension_numbers<[1], [0], [0], [1], [0, 0, 1, 1], [], []>} : vector<128x128xbf16>, vector<128x128xbf16>, vector<128x128xf32> -> vector<128x128xf32>
    %7 = arith.addf %3, %6 : vector<128x128xf32>
    %c0_6 = arith.constant 0 : index
    %c0_7 = arith.constant 0 : index
    %8 = vector.load %arg5[%c0_6, %c0_7] : memref<128x128xf32, #tpu.memory_space<vmem>>, vector<128x128xf32>
    tpu.vector_store %arg5[%c0_6, %c0_7], %7 {strides = array<i32>} : memref<128x128xf32, #tpu.memory_space<vmem>>, vector<128x128xf32>,
    %c0_i32_8 = arith.constant 0 : i32
    %9 = arith.cmpi eq, %arg1, %c0_i32_8 : i32
    %10 = arith.extui %9 : i1 to i32
    %c0_i32_9 = arith.constant 0 : i32
    %11 = arith.cmpi ne, %10, %c0_i32_9 : i32
    scf.if %11 {
      %c0_10 = arith.constant 0 : index
      %c0_11 = arith.constant 0 : index
      %12 = vector.load %arg5[%c0_10, %c0_11] : memref<128x128xf32, #tpu.memory_space<vmem>>, vector<128x128xf32>
      %13 = arith.truncf %12 : vector<128x128xf32> to vector<128x128xbf16>
      %c0_12 = arith.constant 0 : index
      %c0_13 = arith.constant 0 : index
      %14 = vector.load %arg4[%c0_12, %c0_13] : memref<128x128xbf16, #tpu.memory_space<vmem>>, vector<128x128xbf16>
      tpu.vector_store %arg4[%c0_12, %c0_13], %13 {strides = array<i32>} : memref<128x128xbf16, #tpu.memory_space<vmem>>, vector<128x128xbf16>,
    } else {
    }
    return
  }
  func.func @transform_0(%arg0: i32, %arg1: i32) -> (i32, i32) {
    %c0_i32 = arith.constant 0 : i32
    return %arg0, %arg1 : i32, i32
  }
  func.func @transform_1(%arg0: i32, %arg1: i32) -> (i32, i32) {
    %c0_i32 = arith.constant 0 : i32
    %c0_i32_0 = arith.constant 0 : i32
    %c0_i32_1 = arith.constant 0 : i32
    return %c0_i32, %c0_i32_0 : i32, i32
  }
  func.func @transform_2(%arg0: i32, %arg1: i32) -> (i32, i32) {
    %c0_i32 = arith.constant 0 : i32
    %c0_i32_0 = arith.constant 0 : i32
    return %arg0, %c0_i32 : i32, i32
  }
}

module attributes {stable_mosaic.version = 11 : i64} {
  func.func @_propagate_relu_kernel(%arg0: i32, %arg1: i32, %arg2: memref<128x256xf32, #tpu.memory_space<vmem>>, %arg3: memref<256x128xbf16, #tpu.memory_space<vmem>>, %arg4: memref<1x128xf32, #tpu.memory_space<vmem>>, %arg5: memref<128x128xbf16, #tpu.memory_space<vmem>>, %arg6: memref<128x128xf32, #tpu.memory_space<vmem>>) attributes {dimension_semantics = [#tpu.dimension_semantics<parallel>, #tpu.dimension_semantics<arbitrary>], iteration_bounds = array<i64: 2, 1>, scalar_prefetch = 0 : i64, scratch_operands = 1 : i64, tpu.core_type = #tpu.core_type<tc>, window_params = [{transform_indices = @transform_0, window_bounds = array<i64: 128, 256>}, {pipeline_mode = #tpu.pipeline_mode<synchronous>, transform_indices = @transform_1, window_bounds = array<i64: 256, 128>}, {pipeline_mode = #tpu.pipeline_mode<synchronous>, transform_indices = @transform_2, window_bounds = array<i64: 1, 128>}, {transform_indices = @transform_3, window_bounds = array<i64: 128, 128>}]} {
    %c0_i32 = arith.constant 0 : i32
    %0 = arith.cmpi eq, %arg1, %c0_i32 : i32
    %1 = arith.extui %0 : i1 to i32
    %c0_i32_0 = arith.constant 0 : i32
    %2 = arith.cmpi ne, %1, %c0_i32_0 : i32
    scf.if %2 {
      %cst_9 = arith.constant 0.000000e+00 : f32
      %16 = vector.broadcast %cst_9 : f32 to vector<128x128xf32>
      %c0_10 = arith.constant 0 : index
      %c0_11 = arith.constant 0 : index
      %17 = vector.load %arg6[%c0_10, %c0_11] : memref<128x128xf32, #tpu.memory_space<vmem>>, vector<128x128xf32>
      tpu.vector_store %arg6[%c0_10, %c0_11], %16 {strides = array<i32>} : memref<128x128xf32, #tpu.memory_space<vmem>>, vector<128x128xf32>,
    } else {
    }
    %c0 = arith.constant 0 : index
    %c0_1 = arith.constant 0 : index
    %3 = vector.load %arg2[%c0, %c0_1] : memref<128x256xf32, #tpu.memory_space<vmem>>, vector<128x256xf32>
    %4 = arith.truncf %3 : vector<128x256xf32> to vector<128x256xbf16>
    %c256_i32 = arith.constant 256 : i32
    %5 = arith.muli %arg1, %c256_i32 : i32
    %6 = tpu.assume_multiple %5, 256 : i32
    %7 = arith.index_cast %6 : i32 to index
    %c0_2 = arith.constant 0 : index
    %8 = vector.load %arg3[%7, %c0_2] : memref<256x128xbf16, #tpu.memory_space<vmem>>, vector<256x128xbf16>
    %c0_3 = arith.constant 0 : index
    %c0_4 = arith.constant 0 : index
    %9 = vector.load %arg6[%c0_3, %c0_4] : memref<128x128xf32, #tpu.memory_space<vmem>>, vector<128x128xf32>
    %cst = arith.constant dense<0.000000e+00> : vector<128x128xf32>
    %10 = tpu.matmul %4, %8, %cst {dimension_numbers = #tpu.dot_dimension_numbers<[1], [0], [0], [1], [0, 0, 1, 1], [], []>} : vector<128x256xbf16>, vector<256x128xbf16>, vector<128x128xf32> -> vector<128x128xf32>
    %11 = arith.addf %9, %10 : vector<128x128xf32>
    %c0_5 = arith.constant 0 : index
    %c0_6 = arith.constant 0 : index
    %12 = vector.load %arg6[%c0_5, %c0_6] : memref<128x128xf32, #tpu.memory_space<vmem>>, vector<128x128xf32>
    tpu.vector_store %arg6[%c0_5, %c0_6], %11 {strides = array<i32>} : memref<128x128xf32, #tpu.memory_space<vmem>>, vector<128x128xf32>,
    %c0_i32_7 = arith.constant 0 : i32
    %13 = arith.cmpi eq, %arg1, %c0_i32_7 : i32
    %14 = arith.extui %13 : i1 to i32
    %c0_i32_8 = arith.constant 0 : i32
    %15 = arith.cmpi ne, %14, %c0_i32_8 : i32
    scf.if %15 {
      %c0_9 = arith.constant 0 : index
      %c0_10 = arith.constant 0 : index
      %16 = vector.load %arg6[%c0_9, %c0_10] : memref<128x128xf32, #tpu.memory_space<vmem>>, vector<128x128xf32>
      %c0_11 = arith.constant 0 : index
      %c0_12 = arith.constant 0 : index
      %17 = vector.load %arg4[%c0_11, %c0_12] : memref<1x128xf32, #tpu.memory_space<vmem>>, vector<1x128xf32>
      %18 = vector.broadcast %17 : vector<1x128xf32> to vector<128x128xf32>
      %19 = arith.addf %16, %18 : vector<128x128xf32>
      %cst_13 = arith.constant 0.000000e+00 : f32
      %20 = vector.broadcast %cst_13 : f32 to vector<128x128xf32>
      %21 = arith.maximumf %19, %20 : vector<128x128xf32>
      %22 = arith.truncf %21 : vector<128x128xf32> to vector<128x128xbf16>
      %c0_14 = arith.constant 0 : index
      %c0_15 = arith.constant 0 : index
      %23 = vector.load %arg5[%c0_14, %c0_15] : memref<128x128xbf16, #tpu.memory_space<vmem>>, vector<128x128xbf16>
      tpu.vector_store %arg5[%c0_14, %c0_15], %22 {strides = array<i32>} : memref<128x128xbf16, #tpu.memory_space<vmem>>, vector<128x128xbf16>,
    } else {
    }
    return
  }
  func.func @transform_0(%arg0: i32, %arg1: i32) -> (i32, i32) {
    %c0_i32 = arith.constant 0 : i32
    return %arg0, %arg1 : i32, i32
  }
  func.func @transform_1(%arg0: i32, %arg1: i32) -> (i32, i32) {
    %c0_i32 = arith.constant 0 : i32
    %c0_i32_0 = arith.constant 0 : i32
    %c0_i32_1 = arith.constant 0 : i32
    return %c0_i32, %c0_i32_0 : i32, i32
  }
  func.func @transform_2(%arg0: i32, %arg1: i32) -> (i32, i32) {
    %c0_i32 = arith.constant 0 : i32
    %c0_i32_0 = arith.constant 0 : i32
    %c0_i32_1 = arith.constant 0 : i32
    return %c0_i32, %c0_i32_0 : i32, i32
  }
  func.func @transform_3(%arg0: i32, %arg1: i32) -> (i32, i32) {
    %c0_i32 = arith.constant 0 : i32
    %c0_i32_0 = arith.constant 0 : i32
    return %arg0, %c0_i32 : i32, i32
  }
}

</mosaic_0001>

<llo_original>
// kernel: wrapped_gnn_forward.4
$region0: #{wrapped_gnn_forward.4}
  #allocation0 [shape = 'u32[]', space=smem, size = 0x4, offset = 0x4, fixed_abs, tag = 'smem constant byte address 0x4 - core index']
  #allocation1 [shape = 'u32[144,128]{1,0:T(1,128)}', space=vmem, size = 0x12000, scoped, tag = 'internal scratch']
  #allocation2 [shape = 'f32[128,128]{1,0:T(8,128)}', space=vmem, size = 0x10000, scoped, tag = 'scratch operand']
  %s0 = inlined_call_operand.vmem [shape: bf16[256,128], index: 0, kind: input, shape index: {}]
  %s1 = inlined_call_operand.vmem [shape: bf16[128,128], index: 1, kind: input, shape index: {}]
  %s2 = inlined_call_operand.vmem [shape: bf16[256,128], index: 2, kind: output, shape index: {}]
  %s3 = sld [smem:[#allocation0]]
  $region49: #{wrapped_gnn_forward.4} parent=0
    _
  %s5 = ssub.s32 1, %s3
  %s6 = scalar_select 0, %s5, %s3
  loop: start=0, step=1, limit=4
  $region2: #{wrapped_gnn_forward.4} parent=0 // loop_pre_header
    _
  $region3: #{wrapped_gnn_forward.4} parent=0 // loop_header
    %s8 = sphi 0, %s12
    %p9 = scmp.ge.s32.totalorder %s8, 4
    %s15 = sphi 0, %s27
    %s16 = sphi 0, %s23
    %s17 = sphi 0, %s15
    %s18 = sphi 0, %s16
    %s19 = sphi 0, %s17
    %s20 = sphi 0, %s18
    %s32 = sphi 0, %s34
    %s35 = sphi 0, %s32
    %s36 = sphi 0, %s35
    %s52 = sphi 0, %s36
    %s56 = sphi 0, %s56
    %s58 = sphi 0, %s56
    %s59 = sphi 0, %s58
    %s73 = sphi 0, %s59
    %s79 = sphi 0, %s81
    %s82 = sphi 0, %s79
    %s83 = sphi 0, %s82
    %s99 = sphi 0, %s83
  $region4: #{wrapped_gnn_forward.4} parent=0 // loop_header_branch
    %11 = sbr.rel (%p9) target = $region8
  $region5: #{wrapped_gnn_forward.4} parent=0 // loop_body
    %s13 = ssub.s32 %s8, 1
    %s14 = ssub.s32 %s8, 2
    %s21 = sadd.s32 1, %s16
    %p22 = scmp.ge.s32.totalorder %s21, 1
    %s23 = scalar_select %p22, 0, %s21
    %s24 = sadd.s32 1, %s15
    %s25 = scalar_select %p22, %s24, %s15
    %p26 = scmp.ge.s32.totalorder %s25, 2
    %s27 = scalar_select %p26, 0, %s25
    %s28 = ssub.s32 %s15, %s27
    %s29 = ssub.s32 %s16, %s23
    %s30 = sor.u32 %s28, %s29
    %p31 = scmp.eq.s32.totalorder %s30, 0
    %s33 = sadd.s32 %s32, 1
    %s34 = scalar_select %p31, %s32, %s33
    %p37 = pneg %p31
    %p38 = scmp.eq.s32.totalorder %s8, 1
    %p39 = por %p37, %p38
    %p40 = scmp.ne.s32.totalorder %s32, %s35
    %p41 = scmp.eq.s32.totalorder %s8, 0
    %p42 = por %p40, %p41
    %p43 = scmp.ne.s32.totalorder %s32, %s35
    %p44 = scmp.eq.s32.totalorder %s13, 1
    %p45 = por %p43, %p44
    %p46 = scmp.ne.s32.totalorder %s35, %s36
    %p47 = scmp.eq.s32.totalorder %s13, 0
    %p48 = por %p46, %p47
    %p49 = scmp.ne.s32.totalorder %s35, %s36
    %p50 = scmp.eq.s32.totalorder %s14, 1
    %p51 = por %p49, %p50
    %p53 = scmp.ne.s32.totalorder %s36, %s52
    %p54 = scmp.eq.s32.totalorder %s14, 0
    %p55 = por %p53, %p54
    %s57 = sadd.s32 %s56, 1
    %p60 = scmp.eq.s32.totalorder %s8, 1
    %p61 = scmp.ne.s32.totalorder %s56, %s58
    %p62 = scmp.eq.s32.totalorder %s8, 0
    %p63 = por %p61, %p62
    %p64 = scmp.ne.s32.totalorder %s56, %s58
    %p65 = scmp.eq.s32.totalorder %s13, 1
    %p66 = por %p64, %p65
    %p67 = scmp.ne.s32.totalorder %s58, %s59
    %p68 = scmp.eq.s32.totalorder %s13, 0
    %p69 = por %p67, %p68
    %p70 = scmp.ne.s32.totalorder %s58, %s59
    %p71 = scmp.eq.s32.totalorder %s14, 1
    %p72 = por %p70, %p71
    %p74 = scmp.ne.s32.totalorder %s59, %s73
    %p75 = scmp.eq.s32.totalorder %s14, 0
    %p76 = por %p74, %p75
    %s77 = ssub.s32 %s15, %s27
    %p78 = scmp.eq.s32.totalorder %s77, 0
    %s80 = sadd.s32 %s79, 1
    %s81 = scalar_select %p78, %s79, %s80
    %p84 = pneg %p78
    %p85 = scmp.eq.s32.totalorder %s8, 1
    %p86 = por %p84, %p85
    %p87 = scmp.ne.s32.totalorder %s79, %s82
    %p88 = scmp.eq.s32.totalorder %s8, 0
    %p89 = por %p87, %p88
    %p90 = scmp.ne.s32.totalorder %s79, %s82
    %p91 = scmp.eq.s32.totalorder %s13, 1
    %p92 = por %p90, %p91
    %p93 = scmp.ne.s32.totalorder %s82, %s83
    %p94 = scmp.eq.s32.totalorder %s13, 0
    %p95 = por %p93, %p94
    %p96 = scmp.ne.s32.totalorder %s82, %s83
    %p97 = scmp.eq.s32.totalorder %s14, 1
    %p98 = por %p96, %p97
    %p100 = scmp.ne.s32.totalorder %s83, %s99
    %p101 = scmp.eq.s32.totalorder %s14, 0
    %p102 = por %p100, %p101
    %p103 = scmp.le.s32.totalorder 1, %s8
    %p104 = scmp.lt.s32.totalorder %s8, 3
    %p105 = pnand %p103, %p104
    %p106 = pneg %p105
    // Predicated region
    $region9: #{wrapped_gnn_forward.4} parent=5 // pred_check
      _
    $region10: #{wrapped_gnn_forward.4} parent=5 // pred_check_branch
      %108 = sbr.rel (%p105) target = $region12
    $region11: #{wrapped_gnn_forward.4} parent=5 // pred_region
      %s109 = ssub.s32 %s8, 1
      // Predicated region
      $region13: #{wrapped_gnn_forward.4} parent=11 // pred_check
        %p110 = pneg %p69
      $region14: #{wrapped_gnn_forward.4} parent=11 // pred_check_branch
        %112 = sbr.rel (%p110) target = $region16
      $region15: #{wrapped_gnn_forward.4} parent=11 // pred_region
        _
      $region16: #{wrapped_gnn_forward.4} parent=11 // pred_fallthru
        _
    $region12: #{wrapped_gnn_forward.4} parent=5 // pred_fallthru
      _
    %p113 = scmp.lt.s32.totalorder %s8, 2
    // Predicated region
    $region17: #{wrapped_gnn_forward.4} parent=5 // pred_check
      %p114 = pneg %p113
    $region18: #{wrapped_gnn_forward.4} parent=5 // pred_check_branch
      %116 = sbr.rel (%p114) target = $region20
    $region19: #{wrapped_gnn_forward.4} parent=5 // pred_region
      // Predicated region
      $region21: #{wrapped_gnn_forward.4} parent=19 // pred_check
        %p117 = pneg %p42
      $region22: #{wrapped_gnn_forward.4} parent=19 // pred_check_branch
        %119 = sbr.rel (%p117) target = $region24
      $region23: #{wrapped_gnn_forward.4} parent=19 // pred_region
        %s120 = smul.u32 16, %s15
        %p121 = scmp.lt.s32.totalorder %s120, 31
        %s122 = scalar_select %p121, %s120, 31
        %p123 = scmp.lt.s32.totalorder %s16, 0
        %s124 = scalar_select %p123, %s16, 0
        %s125 = sadd.s32 %s124, %s122
        %s126 = smul.addr %s125, 4
        %s127 = scalar_lea.vmem %s0, %s126
        %s128 = smul.u32 16, %s15
      $region24: #{wrapped_gnn_forward.4} parent=19 // pred_fallthru
        _
    $region20: #{wrapped_gnn_forward.4} parent=5 // pred_fallthru
      _
    %p129 = scmp.le.s32.totalorder 1, %s8
    %p130 = scmp.lt.s32.totalorder %s8, 3
    %p131 = pnand %p129, %p130
    %p132 = pneg %p131
    // Predicated region
    $region25: #{wrapped_gnn_forward.4} parent=5 // pred_check
      _
    $region26: #{wrapped_gnn_forward.4} parent=5 // pred_check_branch
      %134 = sbr.rel (%p131) target = $region28
    $region27: #{wrapped_gnn_forward.4} parent=5 // pred_region
      %s135 = ssub.s32 %s8, 1
      %s136 = smul.u32 16, %s17
      %p137 = scmp.lt.s32.totalorder %s136, 31
      %s138 = scalar_select %p137, %s136, 31
      %p139 = scmp.lt.s32.totalorder %s18, 0
      %s140 = scalar_select %p139, %s18, 0
      %s141 = sadd.s32 %s140, %s138
      %s142 = smul.addr %s141, 4
      %s143 = scalar_lea.vmem %s0, %s142
      %p144 = pneg %p48
      %p145 = pneg %p45
      %p146 = pneg %p69
      %p147 = pneg %p66
      %p148 = pneg %p95
      %p149 = pneg %p92
      %s150 = smul.u32 16, %s17
      %p151 = scmp.lt.s32.totalorder %s150, 31
      %s152 = scalar_select %p151, %s150, 31
      %s153 = smul.addr %s152, 4
      %s154 = scalar_lea.vmem %s2, %s153
      %s155 = smul.u32 16, %s17
      %p156 = scmp.lt.s32.totalorder %s155, 31
      %s157 = scalar_select %p156, %s155, 31
      %p158 = scmp.lt.s32.totalorder %s18, 0
      %s159 = scalar_select %p158, %s18, 0
      %s160 = sadd.s32 %s159, %s157
      %s161 = smul.addr %s160, 4
      %s162 = scalar_lea.vmem %s0, %s161
      %s163 = smul.u32 16, %s17
      %s164 = smul.u32 16, %s17
      %p165 = scmp.lt.s32.totalorder %s164, 31
      %s166 = scalar_select %p165, %s164, 31
      %s167 = smul.addr %s166, 4
      %s168 = scalar_lea.vmem %s2, %s167
      %s169 = smul.u32 16, %s17
      %p171 = scmp.eq.s32.totalorder %s18, 0
      // Predicated region
      $region29: #{wrapped_gnn_forward.4} parent=27 // pred_check
        %p172 = pneg %p171
      $region30: #{wrapped_gnn_forward.4} parent=27 // pred_check_branch
        %174 = sbr.rel (%p172) target = $region32
      $region31: #{wrapped_gnn_forward.4} parent=27 // pred_region
        %175 = vst [vmem:[#allocation2] sm:$0xff] 0.0
        %176 = vst [vmem:[#allocation2 + $0x8] sm:$0xff] 0.0
        %177 = vst [vmem:[#allocation2 + $0x10] sm:$0xff] 0.0
        %178 = vst [vmem:[#allocation2 + $0x18] sm:$0xff] 0.0
        %179 = vst [vmem:[#allocation2 + $0x20] sm:$0xff] 0.0
        %180 = vst [vmem:[#allocation2 + $0x28] sm:$0xff] 0.0
        %181 = vst [vmem:[#allocation2 + $0x30] sm:$0xff] 0.0
        %182 = vst [vmem:[#allocation2 + $0x38] sm:$0xff] 0.0
        %183 = vst [vmem:[#allocation2 + $0x40] sm:$0xff] 0.0
        %184 = vst [vmem:[#allocation2 + $0x48] sm:$0xff] 0.0
        %185 = vst [vmem:[#allocation2 + $0x50] sm:$0xff] 0.0
        %186 = vst [vmem:[#allocation2 + $0x58] sm:$0xff] 0.0
        %187 = vst [vmem:[#allocation2 + $0x60] sm:$0xff] 0.0
        %188 = vst [vmem:[#allocation2 + $0x68] sm:$0xff] 0.0
        %189 = vst [vmem:[#allocation2 + $0x70] sm:$0xff] 0.0
        %190 = vst [vmem:[#allocation2 + $0x78] sm:$0xff] 0.0
      $region32: #{wrapped_gnn_forward.4} parent=27 // pred_fallthru
        _
      %v191 = vld [vmem:[#allocation2] sm:$0xff]
      %v192 = vld [vmem:[#allocation2 + $0x8] sm:$0xff]
      %v193 = vld [vmem:[#allocation2 + $0x10] sm:$0xff]
      %v194 = vld [vmem:[#allocation2 + $0x18] sm:$0xff]
      %v195 = vld [vmem:[#allocation2 + $0x20] sm:$0xff]
      %v196 = vld [vmem:[#allocation2 + $0x28] sm:$0xff]
      %v197 = vld [vmem:[#allocation2 + $0x30] sm:$0xff]
      %v198 = vld [vmem:[#allocation2 + $0x38] sm:$0xff]
      %v199 = vld [vmem:[#allocation2 + $0x40] sm:$0xff]
      %v200 = vld [vmem:[#allocation2 + $0x48] sm:$0xff]
      %v201 = vld [vmem:[#allocation2 + $0x50] sm:$0xff]
      %v202 = vld [vmem:[#allocation2 + $0x58] sm:$0xff]
      %v203 = vld [vmem:[#allocation2 + $0x60] sm:$0xff]
      %v204 = vld [vmem:[#allocation2 + $0x68] sm:$0xff]
      %v205 = vld [vmem:[#allocation2 + $0x70] sm:$0xff]
      %v206 = vld [vmem:[#allocation2 + $0x78] sm:$0xff]
      %v207 = vld [vmem:[%s162] sm:$0xf]
      %v208 = vld [vmem:[%s162 + $0x4] sm:$0xf]
      %v209 = vld [vmem:[%s162 + $0x8] sm:$0xf]
      %v210 = vld [vmem:[%s162 + $0xc] sm:$0xf]
      %v211 = vld [vmem:[%s162 + $0x10] sm:$0xf]
      %v212 = vld [vmem:[%s162 + $0x14] sm:$0xf]
      %v213 = vld [vmem:[%s162 + $0x18] sm:$0xf]
      %v214 = vld [vmem:[%s162 + $0x1c] sm:$0xf]
      %v215 = vld [vmem:[%s162 + $0x20] sm:$0xf]
      %v216 = vld [vmem:[%s162 + $0x24] sm:$0xf]
      %v217 = vld [vmem:[%s162 + $0x28] sm:$0xf]
      %v218 = vld [vmem:[%s162 + $0x2c] sm:$0xf]
      %v219 = vld [vmem:[%s162 + $0x30] sm:$0xf]
      %v220 = vld [vmem:[%s162 + $0x34] sm:$0xf]
      %v221 = vld [vmem:[%s162 + $0x38] sm:$0xf]
      %v222 = vld [vmem:[%s162 + $0x3c] sm:$0xf]
      %v223 = vld [vmem:[%s1] sm:$0xf]
      %v224 = vld [vmem:[%s1 + $0x4] sm:$0xf]
      %v225 = vld [vmem:[%s1 + $0x8] sm:$0xf]
      %v226 = vld [vmem:[%s1 + $0xc] sm:$0xf]
      %v227 = vld [vmem:[%s1 + $0x10] sm:$0xf]
      %v228 = vld [vmem:[%s1 + $0x14] sm:$0xf]
      %v229 = vld [vmem:[%s1 + $0x18] sm:$0xf]
      %v230 = vld [vmem:[%s1 + $0x1c] sm:$0xf]
      %v231 = vld [vmem:[%s1 + $0x20] sm:$0xf]
      %v232 = vld [vmem:[%s1 + $0x24] sm:$0xf]
      %v233 = vld [vmem:[%s1 + $0x28] sm:$0xf]
      %v234 = vld [vmem:[%s1 + $0x2c] sm:$0xf]
      %v235 = vld [vmem:[%s1 + $0x30] sm:$0xf]
      %v236 = vld [vmem:[%s1 + $0x34] sm:$0xf]
      %v237 = vld [vmem:[%s1 + $0x38] sm:$0xf]
      %v238 = vld [vmem:[%s1 + $0x3c] sm:$0xf]
      %v255 = vunpack.c.l.b16 %v207
      %v256 = vunpack.c.l.b16 %v208
      %v257 = vunpack.c.l.b16 %v209
      %v258 = vunpack.c.l.b16 %v210
      %v259 = vunpack.c.l.b16 %v211
      %v260 = vunpack.c.l.b16 %v212
      %v261 = vunpack.c.l.b16 %v213
      %v262 = vunpack.c.l.b16 %v214
      %v263 = vunpack.c.l.b16 %v215
      %v264 = vunpack.c.l.b16 %v216
      %v265 = vunpack.c.l.b16 %v217
      %v266 = vunpack.c.l.b16 %v218
      %v267 = vunpack.c.l.b16 %v219
      %v268 = vunpack.c.l.b16 %v220
      %v269 = vunpack.c.l.b16 %v221
      %v270 = vunpack.c.l.b16 %v222
      %v271 = vpack.c.b16 %v256, %v255
      %v272 = vpack.c.b16 %v258, %v257
      %v273 = vpack.c.b16 %v260, %v259
      %v274 = vpack.c.b16 %v262, %v261
      %v275 = vpack.c.b16 %v264, %v263
      %v276 = vpack.c.b16 %v266, %v265
      %v277 = vpack.c.b16 %v268, %v267
      %v278 = vpack.c.b16 %v270, %v269
      %v303 = vunpack.c.l.b16 %v223
      %v304 = vunpack.c.l.b16 %v224
      %v305 = vunpack.c.l.b16 %v225
      %v306 = vunpack.c.l.b16 %v226
      %v307 = vunpack.c.l.b16 %v227
      %v308 = vunpack.c.l.b16 %v228
      %v309 = vunpack.c.l.b16 %v229
      %v310 = vunpack.c.l.b16 %v230
      %v311 = vunpack.c.l.b16 %v231
      %v312 = vunpack.c.l.b16 %v232
      %v313 = vunpack.c.l.b16 %v233
      %v314 = vunpack.c.l.b16 %v234
      %v315 = vunpack.c.l.b16 %v235
      %v316 = vunpack.c.l.b16 %v236
      %v317 = vunpack.c.l.b16 %v237
      %v318 = vunpack.c.l.b16 %v238
      %v319 = vpack.c.b16 %v304, %v303
      %v320 = vpack.c.b16 %v306, %v305
      %v321 = vpack.c.b16 %v308, %v307
      %v322 = vpack.c.b16 %v310, %v309
      %v323 = vpack.c.b16 %v312, %v311
      %v324 = vpack.c.b16 %v314, %v313
      %v325 = vpack.c.b16 %v316, %v315
      %v326 = vpack.c.b16 %v318, %v317
      %335 = vmatprep.subr.bf16.mxu0 0
      %336 = vmatpush1.bf16.msra.mxu0 %v319
      %337 = vmatprep.subr.bf16.mxu0 0
      %338 = vmatpush1.bf16.msra.mxu0 %v320
      %339 = vmatprep.subr.bf16.mxu0 0
      %340 = vmatpush1.bf16.msra.mxu0 %v321
      %341 = vmatprep.subr.bf16.mxu0 0
      %342 = vmatpush1.bf16.msra.mxu0 %v322
      %343 = vmatprep.subr.bf16.mxu0 0
      %344 = vmatpush1.bf16.msra.mxu0 %v323
      %345 = vmatprep.subr.bf16.mxu0 0
      %346 = vmatpush1.bf16.msra.mxu0 %v324
      %347 = vmatprep.subr.bf16.mxu0 0
      %348 = vmatpush1.bf16.msra.mxu0 %v325
      %349 = vmatprep.subr.bf16.mxu0 0
      %350 = vmatpush1.bf16.msra.mxu0 %v326
      %351 = vmatprep.subr.bf16.mxu0 0
      %352 = vmatpush1.bf16.msra.mxu0 0
      %353 = vmatprep.subr.bf16.mxu0 0
      %354 = vmatpush1.bf16.msra.mxu0 0
      %355 = vmatprep.subr.bf16.mxu0 0
      %356 = vmatpush1.bf16.msra.mxu0 0
      %357 = vmatprep.subr.bf16.mxu0 0
      %358 = vmatpush1.bf16.msra.mxu0 0
      %359 = vmatprep.subr.bf16.mxu0 0
      %360 = vmatpush1.bf16.msra.mxu0 0
      %361 = vmatprep.subr.bf16.mxu0 0
      %362 = vmatpush1.bf16.msra.mxu0 0
      %363 = vmatprep.subr.bf16.mxu0 0
      %364 = vmatpush1.bf16.msra.mxu0 0
      %365 = vmatprep.subr.bf16.mxu0 0
      %366 = vmatpush1.bf16.msra.mxu0 0
      %367 = vmatprep.mubr.bf16.mxu0 0
      %368 = vmatmul.mubr.bf16.gmra.mrb[0].mxu0 %v271
      %v369 = vpop.f32.mrb[0].mxu0
      %v370 = vadd.f32 0.0, %v369
      %v371 = vpop.f32.mrb[0].mxu0
      %v372 = vpop.f32.mrb[0].mxu0
      %v373 = vadd.f32 0.0, %v372
      %v374 = vpop.f32.mrb[0].mxu0
      %375 = vmatprep.mubr.bf16.mxu0 0
      %376 = vmatmul.mubr.bf16.gmra.mrb[0].mxu0 %v272
      %v377 = vpop.f32.mrb[0].mxu0
      %v378 = vadd.f32 0.0, %v377
      %v379 = vpop.f32.mrb[0].mxu0
      %v380 = vpop.f32.mrb[0].mxu0
      %v381 = vadd.f32 0.0, %v380
      %v382 = vpop.f32.mrb[0].mxu0
      %383 = vmatprep.mubr.bf16.mxu0 0
      %384 = vmatmul.mubr.bf16.gmra.mrb[0].mxu0 %v273
      %v385 = vpop.f32.mrb[0].mxu0
      %v386 = vadd.f32 0.0, %v385
      %v387 = vpop.f32.mrb[0].mxu0
      %v388 = vpop.f32.mrb[0].mxu0
      %v389 = vadd.f32 0.0, %v388
      %v390 = vpop.f32.mrb[0].mxu0
      %391 = vmatprep.mubr.bf16.mxu0 0
      %392 = vmatmul.mubr.bf16.gmra.mrb[0].mxu0 %v274
      %v393 = vpop.f32.mrb[0].mxu0
      %v394 = vadd.f32 0.0, %v393
      %v395 = vpop.f32.mrb[0].mxu0
      %v396 = vpop.f32.mrb[0].mxu0
      %v397 = vadd.f32 0.0, %v396
      %v398 = vpop.f32.mrb[0].mxu0
      %399 = vmatprep.mubr.bf16.mxu0 0
      %400 = vmatmul.mubr.bf16.gmra.mrb[0].mxu0 %v275
      %v401 = vpop.f32.mrb[0].mxu0
      %v402 = vadd.f32 0.0, %v401
      %v403 = vpop.f32.mrb[0].mxu0
      %v404 = vpop.f32.mrb[0].mxu0
      %v405 = vadd.f32 0.0, %v404
      %v406 = vpop.f32.mrb[0].mxu0
      %407 = vmatprep.mubr.bf16.mxu0 0
      %408 = vmatmul.mubr.bf16.gmra.mrb[0].mxu0 %v276
      %v409 = vpop.f32.mrb[0].mxu0
      %v410 = vadd.f32 0.0, %v409
      %v411 = vpop.f32.mrb[0].mxu0
      %v412 = vpop.f32.mrb[0].mxu0
      %v413 = vadd.f32 0.0, %v412
      %v414 = vpop.f32.mrb[0].mxu0
      %415 = vmatprep.mubr.bf16.mxu0 0
      %416 = vmatmul.mubr.bf16.gmra.mrb[0].mxu0 %v277
      %v417 = vpop.f32.mrb[0].mxu0
      %v418 = vadd.f32 0.0, %v417
      %v419 = vpop.f32.mrb[0].mxu0
      %v420 = vpop.f32.mrb[0].mxu0
      %v421 = vadd.f32 0.0, %v420
      %v422 = vpop.f32.mrb[0].mxu0
      %423 = vmatprep.mubr.bf16.mxu0 0
      %424 = vmatmul.mubr.bf16.gmra.mrb[0].mxu0 %v278
      %v425 = vpop.f32.mrb[0].mxu0
      %v426 = vadd.f32 0.0, %v425
      %v427 = vpop.f32.mrb[0].mxu0
      %v428 = vpop.f32.mrb[0].mxu0
      %v429 = vadd.f32 0.0, %v428
      %v430 = vpop.f32.mrb[0].mxu0
      %431 = vdwg.mxu0
      %v432 = vadd.f32 %v191, %v370
      %v433 = vadd.f32 %v192, %v373
      %v434 = vadd.f32 %v193, %v378
      %v435 = vadd.f32 %v194, %v381
      %v436 = vadd.f32 %v195, %v386
      %v437 = vadd.f32 %v196, %v389
      %v438 = vadd.f32 %v197, %v394
      %v439 = vadd.f32 %v198, %v397
      %v440 = vadd.f32 %v199, %v402
      %v441 = vadd.f32 %v200, %v405
      %v442 = vadd.f32 %v201, %v410
      %v443 = vadd.f32 %v202, %v413
      %v444 = vadd.f32 %v203, %v418
      %v445 = vadd.f32 %v204, %v421
      %v446 = vadd.f32 %v205, %v426
      %v447 = vadd.f32 %v206, %v429
      %448 = vst [vmem:[#allocation2] sm:$0xff] %v432
      %449 = vst [vmem:[#allocation2 + $0x8] sm:$0xff] %v433
      %450 = vst [vmem:[#allocation2 + $0x10] sm:$0xff] %v434
      %451 = vst [vmem:[#allocation2 + $0x18] sm:$0xff] %v435
      %452 = vst [vmem:[#allocation2 + $0x20] sm:$0xff] %v436
      %453 = vst [vmem:[#allocation2 + $0x28] sm:$0xff] %v437
      %454 = vst [vmem:[#allocation2 + $0x30] sm:$0xff] %v438
      %455 = vst [vmem:[#allocation2 + $0x38] sm:$0xff] %v439
      %456 = vst [vmem:[#allocation2 + $0x40] sm:$0xff] %v440
      %457 = vst [vmem:[#allocation2 + $0x48] sm:$0xff] %v441
      %458 = vst [vmem:[#allocation2 + $0x50] sm:$0xff] %v442
      %459 = vst [vmem:[#allocation2 + $0x58] sm:$0xff] %v443
      %460 = vst [vmem:[#allocation2 + $0x60] sm:$0xff] %v444
      %461 = vst [vmem:[#allocation2 + $0x68] sm:$0xff] %v445
      %462 = vst [vmem:[#allocation2 + $0x70] sm:$0xff] %v446
      %463 = vst [vmem:[#allocation2 + $0x78] sm:$0xff] %v447
      // Predicated region
      $region33: #{wrapped_gnn_forward.4} parent=27 // pred_check
        %p464 = pneg %p171
      $region34: #{wrapped_gnn_forward.4} parent=27 // pred_check_branch
        %466 = sbr.rel (%p464) target = $region36
      $region35: #{wrapped_gnn_forward.4} parent=27 // pred_region
        %v467 = vld [vmem:[#allocation2] sm:$0xff]
        %v468 = vld [vmem:[#allocation2 + $0x8] sm:$0xff]
        %v469 = vld [vmem:[#allocation2 + $0x10] sm:$0xff]
        %v470 = vld [vmem:[#allocation2 + $0x18] sm:$0xff]
        %v471 = vld [vmem:[#allocation2 + $0x20] sm:$0xff]
        %v472 = vld [vmem:[#allocation2 + $0x28] sm:$0xff]
        %v473 = vld [vmem:[#allocation2 + $0x30] sm:$0xff]
        %v474 = vld [vmem:[#allocation2 + $0x38] sm:$0xff]
        %v475 = vld [vmem:[#allocation2 + $0x40] sm:$0xff]
        %v476 = vld [vmem:[#allocation2 + $0x48] sm:$0xff]
        %v477 = vld [vmem:[#allocation2 + $0x50] sm:$0xff]
        %v478 = vld [vmem:[#allocation2 + $0x58] sm:$0xff]
        %v479 = vld [vmem:[#allocation2 + $0x60] sm:$0xff]
        %v480 = vld [vmem:[#allocation2 + $0x68] sm:$0xff]
        %v481 = vld [vmem:[#allocation2 + $0x70] sm:$0xff]
        %v482 = vld [vmem:[#allocation2 + $0x78] sm:$0xff]
        %v483 = vpack.c.bf16 %v468, %v467
        %v484 = vpack.c.bf16 %v470, %v469
        %v485 = vpack.c.bf16 %v472, %v471
        %v486 = vpack.c.bf16 %v474, %v473
        %v487 = vpack.c.bf16 %v476, %v475
        %v488 = vpack.c.bf16 %v478, %v477
        %v489 = vpack.c.bf16 %v480, %v479
        %v490 = vpack.c.bf16 %v482, %v481
        %v499 = vunpack.c.l.b16 %v483
        %v500 = vunpack.c.h.b16 %v483
        %v501 = vunpack.c.l.b16 %v484
        %v502 = vunpack.c.h.b16 %v484
        %v503 = vunpack.c.l.b16 %v485
        %v504 = vunpack.c.h.b16 %v485
        %v505 = vunpack.c.l.b16 %v486
        %v506 = vunpack.c.h.b16 %v486
        %v507 = vunpack.c.l.b16 %v487
        %v508 = vunpack.c.h.b16 %v487
        %v509 = vunpack.c.l.b16 %v488
        %v510 = vunpack.c.h.b16 %v488
        %v511 = vunpack.c.l.b16 %v489
        %v512 = vunpack.c.h.b16 %v489
        %v513 = vunpack.c.l.b16 %v490
        %v514 = vunpack.c.h.b16 %v490
        %v515 = vpack.c.b16 %v499, %v499
        %v516 = vpack.c.b16 %v500, %v500
        %v517 = vpack.c.b16 %v501, %v501
        %v518 = vpack.c.b16 %v502, %v502
        %v519 = vpack.c.b16 %v503, %v503
        %v520 = vpack.c.b16 %v504, %v504
        %v521 = vpack.c.b16 %v505, %v505
        %v522 = vpack.c.b16 %v506, %v506
        %v523 = vpack.c.b16 %v507, %v507
        %v524 = vpack.c.b16 %v508, %v508
        %v525 = vpack.c.b16 %v509, %v509
        %v526 = vpack.c.b16 %v510, %v510
        %v527 = vpack.c.b16 %v511, %v511
        %v528 = vpack.c.b16 %v512, %v512
        %v529 = vpack.c.b16 %v513, %v513
        %v530 = vpack.c.b16 %v514, %v514
        %547 = vst [vmem:[%s168] sm:$0xf] %v515
        %548 = vst [vmem:[%s168 + $0x4] sm:$0xf] %v516
        %549 = vst [vmem:[%s168 + $0x8] sm:$0xf] %v517
        %550 = vst [vmem:[%s168 + $0xc] sm:$0xf] %v518
        %551 = vst [vmem:[%s168 + $0x10] sm:$0xf] %v519
        %552 = vst [vmem:[%s168 + $0x14] sm:$0xf] %v520
        %553 = vst [vmem:[%s168 + $0x18] sm:$0xf] %v521
        %554 = vst [vmem:[%s168 + $0x1c] sm:$0xf] %v522
        %555 = vst [vmem:[%s168 + $0x20] sm:$0xf] %v523
        %556 = vst [vmem:[%s168 + $0x24] sm:$0xf] %v524
        %557 = vst [vmem:[%s168 + $0x28] sm:$0xf] %v525
        %558 = vst [vmem:[%s168 + $0x2c] sm:$0xf] %v526
        %559 = vst [vmem:[%s168 + $0x30] sm:$0xf] %v527
        %560 = vst [vmem:[%s168 + $0x34] sm:$0xf] %v528
        %561 = vst [vmem:[%s168 + $0x38] sm:$0xf] %v529
        %562 = vst [vmem:[%s168 + $0x3c] sm:$0xf] %v530
      $region36: #{wrapped_gnn_forward.4} parent=27 // pred_fallthru
        _
      %s563 = smul.u32 16, %s17
      %p564 = scmp.lt.s32.totalorder %s563, 31
      %s565 = scalar_select %p564, %s563, 31
      %s566 = smul.addr %s565, 4
      %s567 = scalar_lea.vmem %s2, %s566
      // Predicated region
      $region37: #{wrapped_gnn_forward.4} parent=27 // pred_check
        %p568 = pneg %p92
      $region38: #{wrapped_gnn_forward.4} parent=27 // pred_check_branch
        %570 = sbr.rel (%p568) target = $region40
      $region39: #{wrapped_gnn_forward.4} parent=27 // pred_region
        %s571 = smul.u32 16, %s17
      $region40: #{wrapped_gnn_forward.4} parent=27 // pred_fallthru
        _
    $region28: #{wrapped_gnn_forward.4} parent=5 // pred_fallthru
      _
    %p572 = scmp.le.s32.totalorder 2, %s8
    // Predicated region
    $region41: #{wrapped_gnn_forward.4} parent=5 // pred_check
      %p573 = pneg %p572
    $region42: #{wrapped_gnn_forward.4} parent=5 // pred_check_branch
      %575 = sbr.rel (%p573) target = $region44
    $region43: #{wrapped_gnn_forward.4} parent=5 // pred_region
      %s576 = ssub.s32 %s8, 2
      // Predicated region
      $region45: #{wrapped_gnn_forward.4} parent=43 // pred_check
        %p577 = pneg %p98
      $region46: #{wrapped_gnn_forward.4} parent=43 // pred_check_branch
        %579 = sbr.rel (%p577) target = $region48
      $region47: #{wrapped_gnn_forward.4} parent=43 // pred_region
        %s580 = smul.u32 16, %s19
        %p581 = scmp.lt.s32.totalorder %s580, 31
        %s582 = scalar_select %p581, %s580, 31
        %s583 = smul.addr %s582, 4
        %s584 = scalar_lea.vmem %s2, %s583
      $region48: #{wrapped_gnn_forward.4} parent=43 // pred_fallthru
        _
    $region44: #{wrapped_gnn_forward.4} parent=5 // pred_fallthru
      _
  $region6: #{wrapped_gnn_forward.4} parent=0 // loop_footer
    %s12 = sadd.s32 1, %s8
  $region7: #{wrapped_gnn_forward.4} parent=0 // loop_footer_branch
    %7 = sbr.rel target = $region3
  $region8: #{wrapped_gnn_forward.4} parent=0 // loop_exit
    _

// kernel: wrapped_gnn_forward.7
$region0: #{wrapped_gnn_forward.7}
  #allocation0 [shape = 'u32[]', space=smem, size = 0x4, offset = 0x4, fixed_abs, tag = 'smem constant byte address 0x4 - core index']
  #allocation1 [shape = 'u32[144,128]{1,0:T(1,128)}', space=vmem, size = 0x12000, scoped, tag = 'internal scratch']
  #allocation2 [shape = 'f32[128,128]{1,0:T(8,128)}', space=vmem, size = 0x10000, scoped, tag = 'scratch operand']
  #allocation3 [shape = 'f32[1,1]{1,0:T(1,128)S(1)}', space=vmem, size = 0x200, scoped, tag = 'scoped memory for wrapped_gnn_forward.7']
  %s0 = inlined_call_operand.vmem [shape: f32[256,256], index: 0, kind: input, shape index: {}]
  %s1 = inlined_call_operand.vmem [shape: bf16[256,128], index: 1, kind: input, shape index: {}]
  %s2 = inlined_call_operand.vmem [shape: f32[1,128], index: 2, kind: input, shape index: {}]
  %s3 = inlined_call_operand.vmem [shape: f32[1,128], index: 3, kind: input, shape index: {}]
  %s4 = inlined_call_operand.<no memory space> [shape: f32[1,1], index: 4, kind: input, shape index: {}]
  %s5 = inlined_call_operand.vmem [shape: f32[256,128], index: 5, kind: output, shape index: {0}]
  %s6 = inlined_call_operand.vmem [shape: f32[256,1], index: 6, kind: output, shape index: {1}]
  %7 = xla_tuple %s5, %s6
  %s8 = sld [smem:[#allocation0]]
  $region69: #{wrapped_gnn_forward.7} parent=0
    _
  %s10 = ssub.s32 1, %s8
  %s11 = scalar_select 0, %s10, %s8
  %v12 = vstv %s4
  %13 = vst [vmem:[#allocation3] sm:$0x1] %v12
  loop: start=0, step=1, limit=4
  $region2: #{wrapped_gnn_forward.7} parent=0 // loop_pre_header
    _
  $region3: #{wrapped_gnn_forward.7} parent=0 // loop_header
    %s15 = sphi 0, %s19
    %p16 = scmp.ge.s32.totalorder %s15, 4
    %s22 = sphi 0, %s34
    %s23 = sphi 0, %s30
    %s24 = sphi 0, %s22
    %s25 = sphi 0, %s23
    %s26 = sphi 0, %s24
    %s27 = sphi 0, %s25
    %s39 = sphi 0, %s41
    %s42 = sphi 0, %s39
    %s43 = sphi 0, %s42
    %s59 = sphi 0, %s43
    %s63 = sphi 0, %s63
    %s65 = sphi 0, %s63
    %s66 = sphi 0, %s65
    %s80 = sphi 0, %s66
    %s84 = sphi 0, %s84
    %s86 = sphi 0, %s84
    %s87 = sphi 0, %s86
    %s101 = sphi 0, %s87
    %s105 = sphi 0, %s105
    %s107 = sphi 0, %s105
    %s108 = sphi 0, %s107
    %s122 = sphi 0, %s108
    %s126 = sphi 0, %s126
    %s128 = sphi 0, %s126
    %s129 = sphi 0, %s128
    %s143 = sphi 0, %s129
    %s149 = sphi 0, %s151
    %s152 = sphi 0, %s149
    %s153 = sphi 0, %s152
    %s169 = sphi 0, %s153
    %s175 = sphi 0, %s177
    %s178 = sphi 0, %s175
    %s179 = sphi 0, %s178
    %s195 = sphi 0, %s179
  $region4: #{wrapped_gnn_forward.7} parent=0 // loop_header_branch
    %18 = sbr.rel (%p16) target = $region8
  $region5: #{wrapped_gnn_forward.7} parent=0 // loop_body
    %s20 = ssub.s32 %s15, 1
    %s21 = ssub.s32 %s15, 2
    %s28 = sadd.s32 1, %s23
    %p29 = scmp.ge.s32.totalorder %s28, 1
    %s30 = scalar_select %p29, 0, %s28
    %s31 = sadd.s32 1, %s22
    %s32 = scalar_select %p29, %s31, %s22
    %p33 = scmp.ge.s32.totalorder %s32, 2
    %s34 = scalar_select %p33, 0, %s32
    %s35 = ssub.s32 %s22, %s34
    %s36 = ssub.s32 %s23, %s30
    %s37 = sor.u32 %s35, %s36
    %p38 = scmp.eq.s32.totalorder %s37, 0
    %s40 = sadd.s32 %s39, 1
    %s41 = scalar_select %p38, %s39, %s40
    %p44 = pneg %p38
    %p45 = scmp.eq.s32.totalorder %s15, 1
    %p46 = por %p44, %p45
    %p47 = scmp.ne.s32.totalorder %s39, %s42
    %p48 = scmp.eq.s32.totalorder %s15, 0
    %p49 = por %p47, %p48
    %p50 = scmp.ne.s32.totalorder %s39, %s42
    %p51 = scmp.eq.s32.totalorder %s20, 1
    %p52 = por %p50, %p51
    %p53 = scmp.ne.s32.totalorder %s42, %s43
    %p54 = scmp.eq.s32.totalorder %s20, 0
    %p55 = por %p53, %p54
    %p56 = scmp.ne.s32.totalorder %s42, %s43
    %p57 = scmp.eq.s32.totalorder %s21, 1
    %p58 = por %p56, %p57
    %p60 = scmp.ne.s32.totalorder %s43, %s59
    %p61 = scmp.eq.s32.totalorder %s21, 0
    %p62 = por %p60, %p61
    %s64 = sadd.s32 %s63, 1
    %p67 = scmp.eq.s32.totalorder %s15, 1
    %p68 = scmp.ne.s32.totalorder %s63, %s65
    %p69 = scmp.eq.s32.totalorder %s15, 0
    %p70 = por %p68, %p69
    %p71 = scmp.ne.s32.totalorder %s63, %s65
    %p72 = scmp.eq.s32.totalorder %s20, 1
    %p73 = por %p71, %p72
    %p74 = scmp.ne.s32.totalorder %s65, %s66
    %p75 = scmp.eq.s32.totalorder %s20, 0
    %p76 = por %p74, %p75
    %p77 = scmp.ne.s32.totalorder %s65, %s66
    %p78 = scmp.eq.s32.totalorder %s21, 1
    %p79 = por %p77, %p78
    %p81 = scmp.ne.s32.totalorder %s66, %s80
    %p82 = scmp.eq.s32.totalorder %s21, 0
    %p83 = por %p81, %p82
    %s85 = sadd.s32 %s84, 1
    %p88 = scmp.eq.s32.totalorder %s15, 1
    %p89 = scmp.ne.s32.totalorder %s84, %s86
    %p90 = scmp.eq.s32.totalorder %s15, 0
    %p91 = por %p89, %p90
    %p92 = scmp.ne.s32.totalorder %s84, %s86
    %p93 = scmp.eq.s32.totalorder %s20, 1
    %p94 = por %p92, %p93
    %p95 = scmp.ne.s32.totalorder %s86, %s87
    %p96 = scmp.eq.s32.totalorder %s20, 0
    %p97 = por %p95, %p96
    %p98 = scmp.ne.s32.totalorder %s86, %s87
    %p99 = scmp.eq.s32.totalorder %s21, 1
    %p100 = por %p98, %p99
    %p102 = scmp.ne.s32.totalorder %s87, %s101
    %p103 = scmp.eq.s32.totalorder %s21, 0
    %p104 = por %p102, %p103
    %s106 = sadd.s32 %s105, 1
    %p109 = scmp.eq.s32.totalorder %s15, 1
    %p110 = scmp.ne.s32.totalorder %s105, %s107
    %p111 = scmp.eq.s32.totalorder %s15, 0
    %p112 = por %p110, %p111
    %p113 = scmp.ne.s32.totalorder %s105, %s107
    %p114 = scmp.eq.s32.totalorder %s20, 1
    %p115 = por %p113, %p114
    %p116 = scmp.ne.s32.totalorder %s107, %s108
    %p117 = scmp.eq.s32.totalorder %s20, 0
    %p118 = por %p116, %p117
    %p119 = scmp.ne.s32.totalorder %s107, %s108
    %p120 = scmp.eq.s32.totalorder %s21, 1
    %p121 = por %p119, %p120
    %p123 = scmp.ne.s32.totalorder %s108, %s122
    %p124 = scmp.eq.s32.totalorder %s21, 0
    %p125 = por %p123, %p124
    %s127 = sadd.s32 %s126, 1
    %p130 = scmp.eq.s32.totalorder %s15, 1
    %p131 = scmp.ne.s32.totalorder %s126, %s128
    %p132 = scmp.eq.s32.totalorder %s15, 0
    %p133 = por %p131, %p132
    %p134 = scmp.ne.s32.totalorder %s126, %s128
    %p135 = scmp.eq.s32.totalorder %s20, 1
    %p136 = por %p134, %p135
    %p137 = scmp.ne.s32.totalorder %s128, %s129
    %p138 = scmp.eq.s32.totalorder %s20, 0
    %p139 = por %p137, %p138
    %p140 = scmp.ne.s32.totalorder %s128, %s129
    %p141 = scmp.eq.s32.totalorder %s21, 1
    %p142 = por %p140, %p141
    %p144 = scmp.ne.s32.totalorder %s129, %s143
    %p145 = scmp.eq.s32.totalorder %s21, 0
    %p146 = por %p144, %p145
    %s147 = ssub.s32 %s22, %s34
    %p148 = scmp.eq.s32.totalorder %s147, 0
    %s150 = sadd.s32 %s149, 1
    %s151 = scalar_select %p148, %s149, %s150
    %p154 = pneg %p148
    %p155 = scmp.eq.s32.totalorder %s15, 1
    %p156 = por %p154, %p155
    %p157 = scmp.ne.s32.totalorder %s149, %s152
    %p158 = scmp.eq.s32.totalorder %s15, 0
    %p159 = por %p157, %p158
    %p160 = scmp.ne.s32.totalorder %s149, %s152
    %p161 = scmp.eq.s32.totalorder %s20, 1
    %p162 = por %p160, %p161
    %p163 = scmp.ne.s32.totalorder %s152, %s153
    %p164 = scmp.eq.s32.totalorder %s20, 0
    %p165 = por %p163, %p164
    %p166 = scmp.ne.s32.totalorder %s152, %s153
    %p167 = scmp.eq.s32.totalorder %s21, 1
    %p168 = por %p166, %p167
    %p170 = scmp.ne.s32.totalorder %s153, %s169
    %p171 = scmp.eq.s32.totalorder %s21, 0
    %p172 = por %p170, %p171
    %s173 = ssub.s32 %s22, %s34
    %p174 = scmp.eq.s32.totalorder %s173, 0
    %s176 = sadd.s32 %s175, 1
    %s177 = scalar_select %p174, %s175, %s176
    %p180 = pneg %p174
    %p181 = scmp.eq.s32.totalorder %s15, 1
    %p182 = por %p180, %p181
    %p183 = scmp.ne.s32.totalorder %s175, %s178
    %p184 = scmp.eq.s32.totalorder %s15, 0
    %p185 = por %p183, %p184
    %p186 = scmp.ne.s32.totalorder %s175, %s178
    %p187 = scmp.eq.s32.totalorder %s20, 1
    %p188 = por %p186, %p187
    %p189 = scmp.ne.s32.totalorder %s178, %s179
    %p190 = scmp.eq.s32.totalorder %s20, 0
    %p191 = por %p189, %p190
    %p192 = scmp.ne.s32.totalorder %s178, %s179
    %p193 = scmp.eq.s32.totalorder %s21, 1
    %p194 = por %p192, %p193
    %p196 = scmp.ne.s32.totalorder %s179, %s195
    %p197 = scmp.eq.s32.totalorder %s21, 0
    %p198 = por %p196, %p197
    %p199 = scmp.le.s32.totalorder 1, %s15
    %p200 = scmp.lt.s32.totalorder %s15, 3
    %p201 = pnand %p199, %p200
    %p202 = pneg %p201
    // Predicated region
    $region9: #{wrapped_gnn_forward.7} parent=5 // pred_check
      _
    $region10: #{wrapped_gnn_forward.7} parent=5 // pred_check_branch
      %204 = sbr.rel (%p201) target = $region12
    $region11: #{wrapped_gnn_forward.7} parent=5 // pred_region
      %s205 = ssub.s32 %s15, 1
      // Predicated region
      $region13: #{wrapped_gnn_forward.7} parent=11 // pred_check
        %p206 = pneg %p76
      $region14: #{wrapped_gnn_forward.7} parent=11 // pred_check_branch
        %208 = sbr.rel (%p206) target = $region16
      $region15: #{wrapped_gnn_forward.7} parent=11 // pred_region
        _
      $region16: #{wrapped_gnn_forward.7} parent=11 // pred_fallthru
        _
      // Predicated region
      $region17: #{wrapped_gnn_forward.7} parent=11 // pred_check
        %p209 = pneg %p97
      $region18: #{wrapped_gnn_forward.7} parent=11 // pred_check_branch
        %211 = sbr.rel (%p209) target = $region20
      $region19: #{wrapped_gnn_forward.7} parent=11 // pred_region
        _
      $region20: #{wrapped_gnn_forward.7} parent=11 // pred_fallthru
        _
      // Predicated region
      $region21: #{wrapped_gnn_forward.7} parent=11 // pred_check
        %p212 = pneg %p118
      $region22: #{wrapped_gnn_forward.7} parent=11 // pred_check_branch
        %214 = sbr.rel (%p212) target = $region24
      $region23: #{wrapped_gnn_forward.7} parent=11 // pred_region
        _
      $region24: #{wrapped_gnn_forward.7} parent=11 // pred_fallthru
        _
      // Predicated region
      $region25: #{wrapped_gnn_forward.7} parent=11 // pred_check
        %p215 = pneg %p139
      $region26: #{wrapped_gnn_forward.7} parent=11 // pred_check_branch
        %217 = sbr.rel (%p215) target = $region28
      $region27: #{wrapped_gnn_forward.7} parent=11 // pred_region
        _
      $region28: #{wrapped_gnn_forward.7} parent=11 // pred_fallthru
        _
    $region12: #{wrapped_gnn_forward.7} parent=5 // pred_fallthru
      _
    %p218 = scmp.lt.s32.totalorder %s15, 2
    // Predicated region
    $region29: #{wrapped_gnn_forward.7} parent=5 // pred_check
      %p219 = pneg %p218
    $region30: #{wrapped_gnn_forward.7} parent=5 // pred_check_branch
      %221 = sbr.rel (%p219) target = $region32
    $region31: #{wrapped_gnn_forward.7} parent=5 // pred_region
      // Predicated region
      $region33: #{wrapped_gnn_forward.7} parent=31 // pred_check
        %p222 = pneg %p49
      $region34: #{wrapped_gnn_forward.7} parent=31 // pred_check_branch
        %224 = sbr.rel (%p222) target = $region36
      $region35: #{wrapped_gnn_forward.7} parent=31 // pred_region
        %s225 = smul.u32 16, %s22
        %s226 = smul.u32 2, %s23
        %p227 = scmp.lt.s32.totalorder %s225, 31
        %s228 = scalar_select %p227, %s225, 31
        %p229 = scmp.lt.s32.totalorder %s226, 1
        %s230 = scalar_select %p229, %s226, 1
        %s231 = smul.addr %s228, 2
        %s232 = sadd.s32 %s230, %s231
        %s233 = smul.addr %s232, 8
        %s234 = scalar_lea.vmem %s0, %s233
        %s235 = smul.u32 16, %s22
        %s236 = smul.u32 2, %s23
      $region36: #{wrapped_gnn_forward.7} parent=31 // pred_fallthru
        _
    $region32: #{wrapped_gnn_forward.7} parent=5 // pred_fallthru
      _
    %p237 = scmp.le.s32.totalorder 1, %s15
    %p238 = scmp.lt.s32.totalorder %s15, 3
    %p239 = pnand %p237, %p238
    %p240 = pneg %p239
    // Predicated region
    $region37: #{wrapped_gnn_forward.7} parent=5 // pred_check
      _
    $region38: #{wrapped_gnn_forward.7} parent=5 // pred_check_branch
      %242 = sbr.rel (%p239) target = $region40
    $region39: #{wrapped_gnn_forward.7} parent=5 // pred_region
      %s243 = ssub.s32 %s15, 1
      %s244 = smul.u32 16, %s24
      %s245 = smul.u32 2, %s25
      %p246 = scmp.lt.s32.totalorder %s244, 31
      %s247 = scalar_select %p246, %s244, 31
      %p248 = scmp.lt.s32.totalorder %s245, 1
      %s249 = scalar_select %p248, %s245, 1
      %s250 = smul.addr %s247, 2
      %s251 = sadd.s32 %s249, %s250
      %s252 = smul.addr %s251, 8
      %s253 = scalar_lea.vmem %s0, %s252
      %p254 = pneg %p55
      %p255 = pneg %p52
      %p256 = pneg %p76
      %p257 = pneg %p73
      %p258 = pneg %p97
      %p259 = pneg %p94
      %p260 = pneg %p118
      %p261 = pneg %p115
      %p262 = pneg %p139
      %p263 = pneg %p136
      %p264 = pneg %p165
      %p265 = pneg %p162
      %s266 = smul.u32 16, %s24
      %p267 = scmp.lt.s32.totalorder %s266, 31
      %s268 = scalar_select %p267, %s266, 31
      %s269 = smul.addr %s268, 8
      %s270 = scalar_lea.vmem %s5, %s269
      %p271 = pneg %p191
      %p272 = pneg %p188
      %s273 = smul.u32 16, %s24
      %p274 = scmp.lt.s32.totalorder %s273, 31
      %s275 = scalar_select %p274, %s273, 31
      %s276 = smul.addr %s275, 8
      %s277 = scalar_lea.vmem %s6, %s276
      %s278 = smul.u32 16, %s24
      %s279 = smul.u32 2, %s25
      %p280 = scmp.lt.s32.totalorder %s278, 31
      %s281 = scalar_select %p280, %s278, 31
      %p282 = scmp.lt.s32.totalorder %s279, 1
      %s283 = scalar_select %p282, %s279, 1
      %s284 = smul.addr %s281, 2
      %s285 = sadd.s32 %s283, %s284
      %s286 = smul.addr %s285, 8
      %s287 = scalar_lea.vmem %s0, %s286
      %s288 = smul.u32 16, %s24
      %s289 = smul.u32 2, %s25
      %s290 = smul.u32 16, %s24
      %p291 = scmp.lt.s32.totalorder %s290, 31
      %s292 = scalar_select %p291, %s290, 31
      %s293 = smul.addr %s292, 8
      %s294 = scalar_lea.vmem %s5, %s293
      %s295 = smul.u32 16, %s24
      %s296 = smul.u32 16, %s24
      %p297 = scmp.lt.s32.totalorder %s296, 31
      %s298 = scalar_select %p297, %s296, 31
      %s299 = smul.addr %s298, 8
      %s300 = scalar_lea.vmem %s6, %s299
      %s301 = smul.u32 16, %s24
      %p303 = scmp.eq.s32.totalorder %s25, 0
      // Predicated region
      $region41: #{wrapped_gnn_forward.7} parent=39 // pred_check
        %p304 = pneg %p303
      $region42: #{wrapped_gnn_forward.7} parent=39 // pred_check_branch
        %306 = sbr.rel (%p304) target = $region44
      $region43: #{wrapped_gnn_forward.7} parent=39 // pred_region
        %307 = vst [vmem:[#allocation2] sm:$0xff] 0.0
        %308 = vst [vmem:[#allocation2 + $0x8] sm:$0xff] 0.0
        %309 = vst [vmem:[#allocation2 + $0x10] sm:$0xff] 0.0
        %310 = vst [vmem:[#allocation2 + $0x18] sm:$0xff] 0.0
        %311 = vst [vmem:[#allocation2 + $0x20] sm:$0xff] 0.0
        %312 = vst [vmem:[#allocation2 + $0x28] sm:$0xff] 0.0
        %313 = vst [vmem:[#allocation2 + $0x30] sm:$0xff] 0.0
        %314 = vst [vmem:[#allocation2 + $0x38] sm:$0xff] 0.0
        %315 = vst [vmem:[#allocation2 + $0x40] sm:$0xff] 0.0
        %316 = vst [vmem:[#allocation2 + $0x48] sm:$0xff] 0.0
        %317 = vst [vmem:[#allocation2 + $0x50] sm:$0xff] 0.0
        %318 = vst [vmem:[#allocation2 + $0x58] sm:$0xff] 0.0
        %319 = vst [vmem:[#allocation2 + $0x60] sm:$0xff] 0.0
        %320 = vst [vmem:[#allocation2 + $0x68] sm:$0xff] 0.0
        %321 = vst [vmem:[#allocation2 + $0x70] sm:$0xff] 0.0
        %322 = vst [vmem:[#allocation2 + $0x78] sm:$0xff] 0.0
      $region44: #{wrapped_gnn_forward.7} parent=39 // pred_fallthru
        _
      %v323 = vld [vmem:[%s287] sm:$0xff]
      %v324 = vld [vmem:[%s287 + $0x8] sm:$0xff]
      %v325 = vld [vmem:[%s287 + $0x10] sm:$0xff]
      %v326 = vld [vmem:[%s287 + $0x18] sm:$0xff]
      %v327 = vld [vmem:[%s287 + $0x20] sm:$0xff]
      %v328 = vld [vmem:[%s287 + $0x28] sm:$0xff]
      %v329 = vld [vmem:[%s287 + $0x30] sm:$0xff]
      %v330 = vld [vmem:[%s287 + $0x38] sm:$0xff]
      %v331 = vld [vmem:[%s287 + $0x40] sm:$0xff]
      %v332 = vld [vmem:[%s287 + $0x48] sm:$0xff]
      %v333 = vld [vmem:[%s287 + $0x50] sm:$0xff]
      %v334 = vld [vmem:[%s287 + $0x58] sm:$0xff]
      %v335 = vld [vmem:[%s287 + $0x60] sm:$0xff]
      %v336 = vld [vmem:[%s287 + $0x68] sm:$0xff]
      %v337 = vld [vmem:[%s287 + $0x70] sm:$0xff]
      %v338 = vld [vmem:[%s287 + $0x78] sm:$0xff]
      %v339 = vld [vmem:[%s287 + $0x80] sm:$0xff]
      %v340 = vld [vmem:[%s287 + $0x88] sm:$0xff]
      %v341 = vld [vmem:[%s287 + $0x90] sm:$0xff]
      %v342 = vld [vmem:[%s287 + $0x98] sm:$0xff]
      %v343 = vld [vmem:[%s287 + $0xa0] sm:$0xff]
      %v344 = vld [vmem:[%s287 + $0xa8] sm:$0xff]
      %v345 = vld [vmem:[%s287 + $0xb0] sm:$0xff]
      %v346 = vld [vmem:[%s287 + $0xb8] sm:$0xff]
      %v347 = vld [vmem:[%s287 + $0xc0] sm:$0xff]
      %v348 = vld [vmem:[%s287 + $0xc8] sm:$0xff]
      %v349 = vld [vmem:[%s287 + $0xd0] sm:$0xff]
      %v350 = vld [vmem:[%s287 + $0xd8] sm:$0xff]
      %v351 = vld [vmem:[%s287 + $0xe0] sm:$0xff]
      %v352 = vld [vmem:[%s287 + $0xe8] sm:$0xff]
      %v353 = vld [vmem:[%s287 + $0xf0] sm:$0xff]
      %v354 = vld [vmem:[%s287 + $0xf8] sm:$0xff]
      %v355 = vpack.c.bf16 %v325, %v323
      %v356 = vpack.c.bf16 %v326, %v324
      %v357 = vpack.c.bf16 %v329, %v327
      %v358 = vpack.c.bf16 %v330, %v328
      %v359 = vpack.c.bf16 %v333, %v331
      %v360 = vpack.c.bf16 %v334, %v332
      %v361 = vpack.c.bf16 %v337, %v335
      %v362 = vpack.c.bf16 %v338, %v336
      %v363 = vpack.c.bf16 %v341, %v339
      %v364 = vpack.c.bf16 %v342, %v340
      %v365 = vpack.c.bf16 %v345, %v343
      %v366 = vpack.c.bf16 %v346, %v344
      %v367 = vpack.c.bf16 %v349, %v347
      %v368 = vpack.c.bf16 %v350, %v348
      %v369 = vpack.c.bf16 %v353, %v351
      %v370 = vpack.c.bf16 %v354, %v352
      %s371 = smul.u32 %s25, 256
      %s372 = sshra.s32 %s371, 3
      %s373 = sand.u32 %s371, 7
      %s374 = smul.addr %s372, 4
      %s375 = scalar_lea.vmem %s1, %s374
      %v376 = vld [vmem:[%s375] sm:$0xf]
      %v377 = vld [vmem:[%s375 + $0x4] sm:$0xf]
      %v378 = vld [vmem:[%s375 + $0x8] sm:$0xf]
      %v379 = vld [vmem:[%s375 + $0xc] sm:$0xf]
      %v380 = vld [vmem:[%s375 + $0x10] sm:$0xf]
      %v381 = vld [vmem:[%s375 + $0x14] sm:$0xf]
      %v382 = vld [vmem:[%s375 + $0x18] sm:$0xf]
      %v383 = vld [vmem:[%s375 + $0x1c] sm:$0xf]
      %v384 = vld [vmem:[%s375 + $0x20] sm:$0xf]
      %v385 = vld [vmem:[%s375 + $0x24] sm:$0xf]
      %v386 = vld [vmem:[%s375 + $0x28] sm:$0xf]
      %v387 = vld [vmem:[%s375 + $0x2c] sm:$0xf]
      %v388 = vld [vmem:[%s375 + $0x30] sm:$0xf]
      %v389 = vld [vmem:[%s375 + $0x34] sm:$0xf]
      %v390 = vld [vmem:[%s375 + $0x38] sm:$0xf]
      %v391 = vld [vmem:[%s375 + $0x3c] sm:$0xf]
      %v392 = vld [vmem:[%s375 + $0x40] sm:$0xf]
      %v393 = vld [vmem:[%s375 + $0x44] sm:$0xf]
      %v394 = vld [vmem:[%s375 + $0x48] sm:$0xf]
      %v395 = vld [vmem:[%s375 + $0x4c] sm:$0xf]
      %v396 = vld [vmem:[%s375 + $0x50] sm:$0xf]
      %v397 = vld [vmem:[%s375 + $0x54] sm:$0xf]
      %v398 = vld [vmem:[%s375 + $0x58] sm:$0xf]
      %v399 = vld [vmem:[%s375 + $0x5c] sm:$0xf]
      %v400 = vld [vmem:[%s375 + $0x60] sm:$0xf]
      %v401 = vld [vmem:[%s375 + $0x64] sm:$0xf]
      %v402 = vld [vmem:[%s375 + $0x68] sm:$0xf]
      %v403 = vld [vmem:[%s375 + $0x6c] sm:$0xf]
      %v404 = vld [vmem:[%s375 + $0x70] sm:$0xf]
      %v405 = vld [vmem:[%s375 + $0x74] sm:$0xf]
      %v406 = vld [vmem:[%s375 + $0x78] sm:$0xf]
      %v407 = vld [vmem:[%s375 + $0x7c] sm:$0xf]
      %v408 = vld [vmem:[#allocation2] sm:$0xff]
      %v409 = vld [vmem:[#allocation2 + $0x8] sm:$0xff]
      %v410 = vld [vmem:[#allocation2 + $0x10] sm:$0xff]
      %v411 = vld [vmem:[#allocation2 + $0x18] sm:$0xff]
      %v412 = vld [vmem:[#allocation2 + $0x20] sm:$0xff]
      %v413 = vld [vmem:[#allocation2 + $0x28] sm:$0xff]
      %v414 = vld [vmem:[#allocation2 + $0x30] sm:$0xff]
      %v415 = vld [vmem:[#allocation2 + $0x38] sm:$0xff]
      %v416 = vld [vmem:[#allocation2 + $0x40] sm:$0xff]
      %v417 = vld [vmem:[#allocation2 + $0x48] sm:$0xff]
      %v418 = vld [vmem:[#allocation2 + $0x50] sm:$0xff]
      %v419 = vld [vmem:[#allocation2 + $0x58] sm:$0xff]
      %v420 = vld [vmem:[#allocation2 + $0x60] sm:$0xff]
      %v421 = vld [vmem:[#allocation2 + $0x68] sm:$0xff]
      %v422 = vld [vmem:[#allocation2 + $0x70] sm:$0xff]
      %v423 = vld [vmem:[#allocation2 + $0x78] sm:$0xff]
      %v456 = vunpack.c.l.b16 %v376
      %v457 = vunpack.c.l.b16 %v377
      %v458 = vunpack.c.l.b16 %v378
      %v459 = vunpack.c.l.b16 %v379
      %v460 = vunpack.c.l.b16 %v380
      %v461 = vunpack.c.l.b16 %v381
      %v462 = vunpack.c.l.b16 %v382
      %v463 = vunpack.c.l.b16 %v383
      %v464 = vunpack.c.l.b16 %v384
      %v465 = vunpack.c.l.b16 %v385
      %v466 = vunpack.c.l.b16 %v386
      %v467 = vunpack.c.l.b16 %v387
      %v468 = vunpack.c.l.b16 %v388
      %v469 = vunpack.c.l.b16 %v389
      %v470 = vunpack.c.l.b16 %v390
      %v471 = vunpack.c.l.b16 %v391
      %v472 = vunpack.c.l.b16 %v392
      %v473 = vunpack.c.l.b16 %v393
      %v474 = vunpack.c.l.b16 %v394
      %v475 = vunpack.c.l.b16 %v395
      %v476 = vunpack.c.l.b16 %v396
      %v477 = vunpack.c.l.b16 %v397
      %v478 = vunpack.c.l.b16 %v398
      %v479 = vunpack.c.l.b16 %v399
      %v480 = vunpack.c.l.b16 %v400
      %v481 = vunpack.c.l.b16 %v401
      %v482 = vunpack.c.l.b16 %v402
      %v483 = vunpack.c.l.b16 %v403
      %v484 = vunpack.c.l.b16 %v404
      %v485 = vunpack.c.l.b16 %v405
      %v486 = vunpack.c.l.b16 %v406
      %v487 = vunpack.c.l.b16 %v407
      %v488 = vpack.c.b16 %v457, %v456
      %v489 = vpack.c.b16 %v459, %v458
      %v490 = vpack.c.b16 %v461, %v460
      %v491 = vpack.c.b16 %v463, %v462
      %v492 = vpack.c.b16 %v465, %v464
      %v493 = vpack.c.b16 %v467, %v466
      %v494 = vpack.c.b16 %v469, %v468
      %v495 = vpack.c.b16 %v471, %v470
      %v496 = vpack.c.b16 %v473, %v472
      %v497 = vpack.c.b16 %v475, %v474
      %v498 = vpack.c.b16 %v477, %v476
      %v499 = vpack.c.b16 %v479, %v478
      %v500 = vpack.c.b16 %v481, %v480
      %v501 = vpack.c.b16 %v483, %v482
      %v502 = vpack.c.b16 %v485, %v484
      %v503 = vpack.c.b16 %v487, %v486
      %520 = vmatprep.subr.bf16.mxu0 0
      %521 = vmatpush1.bf16.msra.mxu0 %v488
      %522 = vmatprep.subr.bf16.mxu0 0
      %523 = vmatpush1.bf16.msra.mxu0 %v489
      %524 = vmatprep.subr.bf16.mxu0 0
      %525 = vmatpush1.bf16.msra.mxu0 %v490
      %526 = vmatprep.subr.bf16.mxu0 0
      %527 = vmatpush1.bf16.msra.mxu0 %v491
      %528 = vmatprep.subr.bf16.mxu0 0
      %529 = vmatpush1.bf16.msra.mxu0 %v492
      %530 = vmatprep.subr.bf16.mxu0 0
      %531 = vmatpush1.bf16.msra.mxu0 %v493
      %532 = vmatprep.subr.bf16.mxu0 0
      %533 = vmatpush1.bf16.msra.mxu0 %v494
      %534 = vmatprep.subr.bf16.mxu0 0
      %535 = vmatpush1.bf16.msra.mxu0 %v495
      %536 = vmatprep.subr.bf16.mxu0 0
      %537 = vmatpush1.bf16.msra.mxu0 %v496
      %538 = vmatprep.subr.bf16.mxu0 0
      %539 = vmatpush1.bf16.msra.mxu0 %v497
      %540 = vmatprep.subr.bf16.mxu0 0
      %541 = vmatpush1.bf16.msra.mxu0 %v498
      %542 = vmatprep.subr.bf16.mxu0 0
      %543 = vmatpush1.bf16.msra.mxu0 %v499
      %544 = vmatprep.subr.bf16.mxu0 0
      %545 = vmatpush1.bf16.msra.mxu0 %v500
      %546 = vmatprep.subr.bf16.mxu0 0
      %547 = vmatpush1.bf16.msra.mxu0 %v501
      %548 = vmatprep.subr.bf16.mxu0 0
      %549 = vmatpush1.bf16.msra.mxu0 %v502
      %550 = vmatprep.subr.bf16.mxu0 0
      %551 = vmatpush1.bf16.msra.mxu0 %v503
      %552 = vmatprep.mubr.bf16.mxu0 %v356
      %553 = vmatmul.mubr.bf16.gmra.mrb[0].mxu0 %v355
      %v554 = vpop.f32.mrb[0].mxu0
      %v555 = vadd.f32 0.0, %v554
      %v556 = vpop.f32.mrb[0].mxu0
      %v557 = vpop.f32.mrb[0].mxu0
      %v558 = vadd.f32 0.0, %v557
      %v559 = vpop.f32.mrb[0].mxu0
      %560 = vmatprep.mubr.bf16.mxu0 %v358
      %561 = vmatmul.mubr.bf16.gmra.mrb[0].mxu0 %v357
      %v562 = vpop.f32.mrb[0].mxu0
      %v563 = vadd.f32 0.0, %v562
      %v564 = vpop.f32.mrb[0].mxu0
      %v565 = vpop.f32.mrb[0].mxu0
      %v566 = vadd.f32 0.0, %v565
      %v567 = vpop.f32.mrb[0].mxu0
      %568 = vmatprep.mubr.bf16.mxu0 %v360
      %569 = vmatmul.mubr.bf16.gmra.mrb[0].mxu0 %v359
      %v570 = vpop.f32.mrb[0].mxu0
      %v571 = vadd.f32 0.0, %v570
      %v572 = vpop.f32.mrb[0].mxu0
      %v573 = vpop.f32.mrb[0].mxu0
      %v574 = vadd.f32 0.0, %v573
      %v575 = vpop.f32.mrb[0].mxu0
      %576 = vmatprep.mubr.bf16.mxu0 %v362
      %577 = vmatmul.mubr.bf16.gmra.mrb[0].mxu0 %v361
      %v578 = vpop.f32.mrb[0].mxu0
      %v579 = vadd.f32 0.0, %v578
      %v580 = vpop.f32.mrb[0].mxu0
      %v581 = vpop.f32.mrb[0].mxu0
      %v582 = vadd.f32 0.0, %v581
      %v583 = vpop.f32.mrb[0].mxu0
      %584 = vmatprep.mubr.bf16.mxu0 %v364
      %585 = vmatmul.mubr.bf16.gmra.mrb[0].mxu0 %v363
      %v586 = vpop.f32.mrb[0].mxu0
      %v587 = vadd.f32 0.0, %v586
      %v588 = vpop.f32.mrb[0].mxu0
      %v589 = vpop.f32.mrb[0].mxu0
      %v590 = vadd.f32 0.0, %v589
      %v591 = vpop.f32.mrb[0].mxu0
      %592 = vmatprep.mubr.bf16.mxu0 %v366
      %593 = vmatmul.mubr.bf16.gmra.mrb[0].mxu0 %v365
      %v594 = vpop.f32.mrb[0].mxu0
      %v595 = vadd.f32 0.0, %v594
      %v596 = vpop.f32.mrb[0].mxu0
      %v597 = vpop.f32.mrb[0].mxu0
      %v598 = vadd.f32 0.0, %v597
      %v599 = vpop.f32.mrb[0].mxu0
      %600 = vmatprep.mubr.bf16.mxu0 %v368
      %601 = vmatmul.mubr.bf16.gmra.mrb[0].mxu0 %v367
      %v602 = vpop.f32.mrb[0].mxu0
      %v603 = vadd.f32 0.0, %v602
      %v604 = vpop.f32.mrb[0].mxu0
      %v605 = vpop.f32.mrb[0].mxu0
      %v606 = vadd.f32 0.0, %v605
      %v607 = vpop.f32.mrb[0].mxu0
      %608 = vmatprep.mubr.bf16.mxu0 %v370
      %609 = vmatmul.mubr.bf16.gmra.mrb[0].mxu0 %v369
      %v610 = vpop.f32.mrb[0].mxu0
      %v611 = vadd.f32 0.0, %v610
      %v612 = vpop.f32.mrb[0].mxu0
      %v613 = vpop.f32.mrb[0].mxu0
      %v614 = vadd.f32 0.0, %v613
      %v615 = vpop.f32.mrb[0].mxu0
      %616 = vdwg.mxu0
      %v617 = vadd.f32 %v408, %v555
      %v618 = vadd.f32 %v409, %v558
      %v619 = vadd.f32 %v410, %v563
      %v620 = vadd.f32 %v411, %v566
      %v621 = vadd.f32 %v412, %v571
      %v622 = vadd.f32 %v413, %v574
      %v623 = vadd.f32 %v414, %v579
      %v624 = vadd.f32 %v415, %v582
      %v625 = vadd.f32 %v416, %v587
      %v626 = vadd.f32 %v417, %v590
      %v627 = vadd.f32 %v418, %v595
      %v628 = vadd.f32 %v419, %v598
      %v629 = vadd.f32 %v420, %v603
      %v630 = vadd.f32 %v421, %v606
      %v631 = vadd.f32 %v422, %v611
      %v632 = vadd.f32 %v423, %v614
      %633 = vst [vmem:[#allocation2] sm:$0xff] %v617
      %634 = vst [vmem:[#allocation2 + $0x8] sm:$0xff] %v618
      %635 = vst [vmem:[#allocation2 + $0x10] sm:$0xff] %v619
      %636 = vst [vmem:[#allocation2 + $0x18] sm:$0xff] %v620
      %637 = vst [vmem:[#allocation2 + $0x20] sm:$0xff] %v621
      %638 = vst [vmem:[#allocation2 + $0x28] sm:$0xff] %v622
      %639 = vst [vmem:[#allocation2 + $0x30] sm:$0xff] %v623
      %640 = vst [vmem:[#allocation2 + $0x38] sm:$0xff] %v624
      %641 = vst [vmem:[#allocation2 + $0x40] sm:$0xff] %v625
      %642 = vst [vmem:[#allocation2 + $0x48] sm:$0xff] %v626
      %643 = vst [vmem:[#allocation2 + $0x50] sm:$0xff] %v627
      %644 = vst [vmem:[#allocation2 + $0x58] sm:$0xff] %v628
      %645 = vst [vmem:[#allocation2 + $0x60] sm:$0xff] %v629
      %646 = vst [vmem:[#allocation2 + $0x68] sm:$0xff] %v630
      %647 = vst [vmem:[#allocation2 + $0x70] sm:$0xff] %v631
      %648 = vst [vmem:[#allocation2 + $0x78] sm:$0xff] %v632
      // Predicated region
      $region45: #{wrapped_gnn_forward.7} parent=39 // pred_check
        %p649 = pneg %p303
      $region46: #{wrapped_gnn_forward.7} parent=39 // pred_check_branch
        %651 = sbr.rel (%p649) target = $region48
      $region47: #{wrapped_gnn_forward.7} parent=39 // pred_region
        %v652 = vld [vmem:[#allocation2] sm:$0xff]
        %v653 = vld [vmem:[#allocation2 + $0x8] sm:$0xff]
        %v654 = vld [vmem:[#allocation2 + $0x10] sm:$0xff]
        %v655 = vld [vmem:[#allocation2 + $0x18] sm:$0xff]
        %v656 = vld [vmem:[#allocation2 + $0x20] sm:$0xff]
        %v657 = vld [vmem:[#allocation2 + $0x28] sm:$0xff]
        %v658 = vld [vmem:[#allocation2 + $0x30] sm:$0xff]
        %v659 = vld [vmem:[#allocation2 + $0x38] sm:$0xff]
        %v660 = vld [vmem:[#allocation2 + $0x40] sm:$0xff]
        %v661 = vld [vmem:[#allocation2 + $0x48] sm:$0xff]
        %v662 = vld [vmem:[#allocation2 + $0x50] sm:$0xff]
        %v663 = vld [vmem:[#allocation2 + $0x58] sm:$0xff]
        %v664 = vld [vmem:[#allocation2 + $0x60] sm:$0xff]
        %v665 = vld [vmem:[#allocation2 + $0x68] sm:$0xff]
        %v666 = vld [vmem:[#allocation2 + $0x70] sm:$0xff]
        %v667 = vld [vmem:[#allocation2 + $0x78] sm:$0xff]
        %v668 = vld [vmem:[%s2] sm:$0x1]
        %v670 = vlaneseq
        %v671 = vshrl.u32 %v670, 7
        %v672 = vsub.s32 0, %v671
        %v673 = vrot.slane %v668, %v672
        %v675 = vadd.f32 %v652, %v673
        %v676 = vadd.f32 %v653, %v673
        %v677 = vadd.f32 %v654, %v673
        %v678 = vadd.f32 %v655, %v673
        %v679 = vadd.f32 %v656, %v673
        %v680 = vadd.f32 %v657, %v673
        %v681 = vadd.f32 %v658, %v673
        %v682 = vadd.f32 %v659, %v673
        %v683 = vadd.f32 %v660, %v673
        %v684 = vadd.f32 %v661, %v673
        %v685 = vadd.f32 %v662, %v673
        %v686 = vadd.f32 %v663, %v673
        %v687 = vadd.f32 %v664, %v673
        %v688 = vadd.f32 %v665, %v673
        %v689 = vadd.f32 %v666, %v673
        %v690 = vadd.f32 %v667, %v673
        %691 = vst [vmem:[%s294] sm:$0xff] %v675
        %692 = vst [vmem:[%s294 + $0x8] sm:$0xff] %v676
        %693 = vst [vmem:[%s294 + $0x10] sm:$0xff] %v677
        %694 = vst [vmem:[%s294 + $0x18] sm:$0xff] %v678
        %695 = vst [vmem:[%s294 + $0x20] sm:$0xff] %v679
        %696 = vst [vmem:[%s294 + $0x28] sm:$0xff] %v680
        %697 = vst [vmem:[%s294 + $0x30] sm:$0xff] %v681
        %698 = vst [vmem:[%s294 + $0x38] sm:$0xff] %v682
        %699 = vst [vmem:[%s294 + $0x40] sm:$0xff] %v683
        %700 = vst [vmem:[%s294 + $0x48] sm:$0xff] %v684
        %701 = vst [vmem:[%s294 + $0x50] sm:$0xff] %v685
        %702 = vst [vmem:[%s294 + $0x58] sm:$0xff] %v686
        %703 = vst [vmem:[%s294 + $0x60] sm:$0xff] %v687
        %704 = vst [vmem:[%s294 + $0x68] sm:$0xff] %v688
        %705 = vst [vmem:[%s294 + $0x70] sm:$0xff] %v689
        %706 = vst [vmem:[%s294 + $0x78] sm:$0xff] %v690
        %v707 = vld [vmem:[%s3] sm:$0x1]
        %v709 = vlaneseq
        %v710 = vshrl.u32 %v709, 7
        %v711 = vsub.s32 0, %v710
        %v712 = vrot.slane %v707, %v711
        %v714 = vmul.f32 %v675, %v712
        %v715 = vmul.f32 %v676, %v712
        %v716 = vmul.f32 %v677, %v712
        %v717 = vmul.f32 %v678, %v712
        %v718 = vmul.f32 %v679, %v712
        %v719 = vmul.f32 %v680, %v712
        %v720 = vmul.f32 %v681, %v712
        %v721 = vmul.f32 %v682, %v712
        %v722 = vmul.f32 %v683, %v712
        %v723 = vmul.f32 %v684, %v712
        %v724 = vmul.f32 %v685, %v712
        %v725 = vmul.f32 %v686, %v712
        %v726 = vmul.f32 %v687, %v712
        %v727 = vmul.f32 %v688, %v712
        %v728 = vmul.f32 %v689, %v712
        %v729 = vmul.f32 %v690, %v712
        %730 = vadd.xlane.f32.xlu0 %v714
        %v731 = vpop.xlane.xlu0 %730
        %732 = vadd.xlane.f32.xlu0 %v715
        %v733 = vpop.xlane.xlu0 %732
        %734 = vadd.xlane.f32.xlu0 %v716
        %v735 = vpop.xlane.xlu0 %734
        %736 = vadd.xlane.f32.xlu0 %v717
        %v737 = vpop.xlane.xlu0 %736
        %738 = vadd.xlane.f32.xlu0 %v718
        %v739 = vpop.xlane.xlu0 %738
        %740 = vadd.xlane.f32.xlu0 %v719
        %v741 = vpop.xlane.xlu0 %740
        %742 = vadd.xlane.f32.xlu0 %v720
        %v743 = vpop.xlane.xlu0 %742
        %744 = vadd.xlane.f32.xlu0 %v721
        %v745 = vpop.xlane.xlu0 %744
        %746 = vadd.xlane.f32.xlu0 %v722
        %v747 = vpop.xlane.xlu0 %746
        %748 = vadd.xlane.f32.xlu0 %v723
        %v749 = vpop.xlane.xlu0 %748
        %750 = vadd.xlane.f32.xlu0 %v724
        %v751 = vpop.xlane.xlu0 %750
        %752 = vadd.xlane.f32.xlu0 %v725
        %v753 = vpop.xlane.xlu0 %752
        %754 = vadd.xlane.f32.xlu0 %v726
        %v755 = vpop.xlane.xlu0 %754
        %756 = vadd.xlane.f32.xlu0 %v727
        %v757 = vpop.xlane.xlu0 %756
        %758 = vadd.xlane.f32.xlu0 %v728
        %v759 = vpop.xlane.xlu0 %758
        %760 = vadd.xlane.f32.xlu0 %v729
        %v761 = vpop.xlane.xlu0 %760
        %v762 = vld [vmem:[#allocation3] sm:$0x1]
        %v764 = vlaneseq
        %v765 = vshrl.u32 %v764, 7
        %v766 = vsub.s32 0, %v765
        %v767 = vrot.slane %v762, %v766
        %v769 = vadd.f32 %v731, %v767
        %v770 = vadd.f32 %v733, %v767
        %v771 = vadd.f32 %v735, %v767
        %v772 = vadd.f32 %v737, %v767
        %v773 = vadd.f32 %v739, %v767
        %v774 = vadd.f32 %v741, %v767
        %v775 = vadd.f32 %v743, %v767
        %v776 = vadd.f32 %v745, %v767
        %v777 = vadd.f32 %v747, %v767
        %v778 = vadd.f32 %v749, %v767
        %v779 = vadd.f32 %v751, %v767
        %v780 = vadd.f32 %v753, %v767
        %v781 = vadd.f32 %v755, %v767
        %v782 = vadd.f32 %v757, %v767
        %v783 = vadd.f32 %v759, %v767
        %v784 = vadd.f32 %v761, %v767
        %vm785 = vcmask 7168
        %786 = vst.msk [vmem:[%s300] sm:$0xff] %vm785, %v769
        %787 = vst.msk [vmem:[%s300 + $0x8] sm:$0xff] %vm785, %v770
        %788 = vst.msk [vmem:[%s300 + $0x10] sm:$0xff] %vm785, %v771
        %789 = vst.msk [vmem:[%s300 + $0x18] sm:$0xff] %vm785, %v772
        %790 = vst.msk [vmem:[%s300 + $0x20] sm:$0xff] %vm785, %v773
        %791 = vst.msk [vmem:[%s300 + $0x28] sm:$0xff] %vm785, %v774
        %792 = vst.msk [vmem:[%s300 + $0x30] sm:$0xff] %vm785, %v775
        %793 = vst.msk [vmem:[%s300 + $0x38] sm:$0xff] %vm785, %v776
        %794 = vst.msk [vmem:[%s300 + $0x40] sm:$0xff] %vm785, %v777
        %795 = vst.msk [vmem:[%s300 + $0x48] sm:$0xff] %vm785, %v778
        %796 = vst.msk [vmem:[%s300 + $0x50] sm:$0xff] %vm785, %v779
        %797 = vst.msk [vmem:[%s300 + $0x58] sm:$0xff] %vm785, %v780
        %798 = vst.msk [vmem:[%s300 + $0x60] sm:$0xff] %vm785, %v781
        %799 = vst.msk [vmem:[%s300 + $0x68] sm:$0xff] %vm785, %v782
        %800 = vst.msk [vmem:[%s300 + $0x70] sm:$0xff] %vm785, %v783
        %801 = vst.msk [vmem:[%s300 + $0x78] sm:$0xff] %vm785, %v784
      $region48: #{wrapped_gnn_forward.7} parent=39 // pred_fallthru
        _
      %s802 = smul.u32 16, %s24
      %p803 = scmp.lt.s32.totalorder %s802, 31
      %s804 = scalar_select %p803, %s802, 31
      %s805 = smul.addr %s804, 8
      %s806 = scalar_lea.vmem %s5, %s805
      %s807 = smul.u32 16, %s24
      %p808 = scmp.lt.s32.totalorder %s807, 31
      %s809 = scalar_select %p808, %s807, 31
      %s810 = smul.addr %s809, 8
      %s811 = scalar_lea.vmem %s6, %s810
      // Predicated region
      $region49: #{wrapped_gnn_forward.7} parent=39 // pred_check
        %p812 = pneg %p162
      $region50: #{wrapped_gnn_forward.7} parent=39 // pred_check_branch
        %814 = sbr.rel (%p812) target = $region52
      $region51: #{wrapped_gnn_forward.7} parent=39 // pred_region
        %s815 = smul.u32 16, %s24
      $region52: #{wrapped_gnn_forward.7} parent=39 // pred_fallthru
        _
      // Predicated region
      $region53: #{wrapped_gnn_forward.7} parent=39 // pred_check
        %p816 = pneg %p188
      $region54: #{wrapped_gnn_forward.7} parent=39 // pred_check_branch
        %818 = sbr.rel (%p816) target = $region56
      $region55: #{wrapped_gnn_forward.7} parent=39 // pred_region
        %s819 = smul.u32 16, %s24
      $region56: #{wrapped_gnn_forward.7} parent=39 // pred_fallthru
        _
    $region40: #{wrapped_gnn_forward.7} parent=5 // pred_fallthru
      _
    %p820 = scmp.le.s32.totalorder 2, %s15
    // Predicated region
    $region57: #{wrapped_gnn_forward.7} parent=5 // pred_check
      %p821 = pneg %p820
    $region58: #{wrapped_gnn_forward.7} parent=5 // pred_check_branch
      %823 = sbr.rel (%p821) target = $region60
    $region59: #{wrapped_gnn_forward.7} parent=5 // pred_region
      %s824 = ssub.s32 %s15, 2
      // Predicated region
      $region61: #{wrapped_gnn_forward.7} parent=59 // pred_check
        %p825 = pneg %p168
      $region62: #{wrapped_gnn_forward.7} parent=59 // pred_check_branch
        %827 = sbr.rel (%p825) target = $region64
      $region63: #{wrapped_gnn_forward.7} parent=59 // pred_region
        %s828 = smul.u32 16, %s26
        %p829 = scmp.lt.s32.totalorder %s828, 31
        %s830 = scalar_select %p829, %s828, 31
        %s831 = smul.addr %s830, 8
        %s832 = scalar_lea.vmem %s5, %s831
      $region64: #{wrapped_gnn_forward.7} parent=59 // pred_fallthru
        _
      // Predicated region
      $region65: #{wrapped_gnn_forward.7} parent=59 // pred_check
        %p833 = pneg %p194
      $region66: #{wrapped_gnn_forward.7} parent=59 // pred_check_branch
        %835 = sbr.rel (%p833) target = $region68
      $region67: #{wrapped_gnn_forward.7} parent=59 // pred_region
        %s836 = smul.u32 16, %s26
        %p837 = scmp.lt.s32.totalorder %s836, 31
        %s838 = scalar_select %p837, %s836, 31
        %s839 = smul.addr %s838, 8
        %s840 = scalar_lea.vmem %s6, %s839
      $region68: #{wrapped_gnn_forward.7} parent=59 // pred_fallthru
        _
    $region60: #{wrapped_gnn_forward.7} parent=5 // pred_fallthru
      _
  $region6: #{wrapped_gnn_forward.7} parent=0 // loop_footer
    %s19 = sadd.s32 1, %s15
  $region7: #{wrapped_gnn_forward.7} parent=0 // loop_footer_branch
    %14 = sbr.rel target = $region3
  $region8: #{wrapped_gnn_forward.7} parent=0 // loop_exit
    _

// kernel: wrapped_gnn_forward.5
$region0: #{wrapped_gnn_forward.5}
  #allocation0 [shape = 'u32[]', space=smem, size = 0x4, offset = 0x4, fixed_abs, tag = 'smem constant byte address 0x4 - core index']
  #allocation1 [shape = 'u32[144,128]{1,0:T(1,128)}', space=vmem, size = 0x12000, scoped, tag = 'internal scratch']
  #allocation2 [shape = 'f32[128,128]{1,0:T(8,128)}', space=vmem, size = 0x10000, scoped, tag = 'scratch operand']
  %s0 = inlined_call_operand.vmem [shape: f32[256,256], index: 0, kind: input, shape index: {}]
  %s1 = inlined_call_operand.vmem [shape: bf16[256,128], index: 1, kind: input, shape index: {}]
  %s2 = inlined_call_operand.vmem [shape: f32[1,128], index: 2, kind: input, shape index: {}]
  %s3 = inlined_call_operand.vmem [shape: bf16[256,128], index: 3, kind: output, shape index: {}]
  %s4 = sld [smem:[#allocation0]]
  $region53: #{wrapped_gnn_forward.5} parent=0
    _
  %s6 = ssub.s32 1, %s4
  %s7 = scalar_select 0, %s6, %s4
  loop: start=0, step=1, limit=4
  $region2: #{wrapped_gnn_forward.5} parent=0 // loop_pre_header
    _
  $region3: #{wrapped_gnn_forward.5} parent=0 // loop_header
    %s9 = sphi 0, %s13
    %p10 = scmp.ge.s32.totalorder %s9, 4
    %s16 = sphi 0, %s28
    %s17 = sphi 0, %s24
    %s18 = sphi 0, %s16
    %s19 = sphi 0, %s17
    %s20 = sphi 0, %s18
    %s21 = sphi 0, %s19
    %s33 = sphi 0, %s35
    %s36 = sphi 0, %s33
    %s37 = sphi 0, %s36
    %s53 = sphi 0, %s37
    %s57 = sphi 0, %s57
    %s59 = sphi 0, %s57
    %s60 = sphi 0, %s59
    %s74 = sphi 0, %s60
    %s78 = sphi 0, %s78
    %s80 = sphi 0, %s78
    %s81 = sphi 0, %s80
    %s95 = sphi 0, %s81
    %s101 = sphi 0, %s103
    %s104 = sphi 0, %s101
    %s105 = sphi 0, %s104
    %s121 = sphi 0, %s105
  $region4: #{wrapped_gnn_forward.5} parent=0 // loop_header_branch
    %12 = sbr.rel (%p10) target = $region8
  $region5: #{wrapped_gnn_forward.5} parent=0 // loop_body
    %s14 = ssub.s32 %s9, 1
    %s15 = ssub.s32 %s9, 2
    %s22 = sadd.s32 1, %s17
    %p23 = scmp.ge.s32.totalorder %s22, 1
    %s24 = scalar_select %p23, 0, %s22
    %s25 = sadd.s32 1, %s16
    %s26 = scalar_select %p23, %s25, %s16
    %p27 = scmp.ge.s32.totalorder %s26, 2
    %s28 = scalar_select %p27, 0, %s26
    %s29 = ssub.s32 %s16, %s28
    %s30 = ssub.s32 %s17, %s24
    %s31 = sor.u32 %s29, %s30
    %p32 = scmp.eq.s32.totalorder %s31, 0
    %s34 = sadd.s32 %s33, 1
    %s35 = scalar_select %p32, %s33, %s34
    %p38 = pneg %p32
    %p39 = scmp.eq.s32.totalorder %s9, 1
    %p40 = por %p38, %p39
    %p41 = scmp.ne.s32.totalorder %s33, %s36
    %p42 = scmp.eq.s32.totalorder %s9, 0
    %p43 = por %p41, %p42
    %p44 = scmp.ne.s32.totalorder %s33, %s36
    %p45 = scmp.eq.s32.totalorder %s14, 1
    %p46 = por %p44, %p45
    %p47 = scmp.ne.s32.totalorder %s36, %s37
    %p48 = scmp.eq.s32.totalorder %s14, 0
    %p49 = por %p47, %p48
    %p50 = scmp.ne.s32.totalorder %s36, %s37
    %p51 = scmp.eq.s32.totalorder %s15, 1
    %p52 = por %p50, %p51
    %p54 = scmp.ne.s32.totalorder %s37, %s53
    %p55 = scmp.eq.s32.totalorder %s15, 0
    %p56 = por %p54, %p55
    %s58 = sadd.s32 %s57, 1
    %p61 = scmp.eq.s32.totalorder %s9, 1
    %p62 = scmp.ne.s32.totalorder %s57, %s59
    %p63 = scmp.eq.s32.totalorder %s9, 0
    %p64 = por %p62, %p63
    %p65 = scmp.ne.s32.totalorder %s57, %s59
    %p66 = scmp.eq.s32.totalorder %s14, 1
    %p67 = por %p65, %p66
    %p68 = scmp.ne.s32.totalorder %s59, %s60
    %p69 = scmp.eq.s32.totalorder %s14, 0
    %p70 = por %p68, %p69
    %p71 = scmp.ne.s32.totalorder %s59, %s60
    %p72 = scmp.eq.s32.totalorder %s15, 1
    %p73 = por %p71, %p72
    %p75 = scmp.ne.s32.totalorder %s60, %s74
    %p76 = scmp.eq.s32.totalorder %s15, 0
    %p77 = por %p75, %p76
    %s79 = sadd.s32 %s78, 1
    %p82 = scmp.eq.s32.totalorder %s9, 1
    %p83 = scmp.ne.s32.totalorder %s78, %s80
    %p84 = scmp.eq.s32.totalorder %s9, 0
    %p85 = por %p83, %p84
    %p86 = scmp.ne.s32.totalorder %s78, %s80
    %p87 = scmp.eq.s32.totalorder %s14, 1
    %p88 = por %p86, %p87
    %p89 = scmp.ne.s32.totalorder %s80, %s81
    %p90 = scmp.eq.s32.totalorder %s14, 0
    %p91 = por %p89, %p90
    %p92 = scmp.ne.s32.totalorder %s80, %s81
    %p93 = scmp.eq.s32.totalorder %s15, 1
    %p94 = por %p92, %p93
    %p96 = scmp.ne.s32.totalorder %s81, %s95
    %p97 = scmp.eq.s32.totalorder %s15, 0
    %p98 = por %p96, %p97
    %s99 = ssub.s32 %s16, %s28
    %p100 = scmp.eq.s32.totalorder %s99, 0
    %s102 = sadd.s32 %s101, 1
    %s103 = scalar_select %p100, %s101, %s102
    %p106 = pneg %p100
    %p107 = scmp.eq.s32.totalorder %s9, 1
    %p108 = por %p106, %p107
    %p109 = scmp.ne.s32.totalorder %s101, %s104
    %p110 = scmp.eq.s32.totalorder %s9, 0
    %p111 = por %p109, %p110
    %p112 = scmp.ne.s32.totalorder %s101, %s104
    %p113 = scmp.eq.s32.totalorder %s14, 1
    %p114 = por %p112, %p113
    %p115 = scmp.ne.s32.totalorder %s104, %s105
    %p116 = scmp.eq.s32.totalorder %s14, 0
    %p117 = por %p115, %p116
    %p118 = scmp.ne.s32.totalorder %s104, %s105
    %p119 = scmp.eq.s32.totalorder %s15, 1
    %p120 = por %p118, %p119
    %p122 = scmp.ne.s32.totalorder %s105, %s121
    %p123 = scmp.eq.s32.totalorder %s15, 0
    %p124 = por %p122, %p123
    %p125 = scmp.le.s32.totalorder 1, %s9
    %p126 = scmp.lt.s32.totalorder %s9, 3
    %p127 = pnand %p125, %p126
    %p128 = pneg %p127
    // Predicated region
    $region9: #{wrapped_gnn_forward.5} parent=5 // pred_check
      _
    $region10: #{wrapped_gnn_forward.5} parent=5 // pred_check_branch
      %130 = sbr.rel (%p127) target = $region12
    $region11: #{wrapped_gnn_forward.5} parent=5 // pred_region
      %s131 = ssub.s32 %s9, 1
      // Predicated region
      $region13: #{wrapped_gnn_forward.5} parent=11 // pred_check
        %p132 = pneg %p70
      $region14: #{wrapped_gnn_forward.5} parent=11 // pred_check_branch
        %134 = sbr.rel (%p132) target = $region16
      $region15: #{wrapped_gnn_forward.5} parent=11 // pred_region
        _
      $region16: #{wrapped_gnn_forward.5} parent=11 // pred_fallthru
        _
      // Predicated region
      $region17: #{wrapped_gnn_forward.5} parent=11 // pred_check
        %p135 = pneg %p91
      $region18: #{wrapped_gnn_forward.5} parent=11 // pred_check_branch
        %137 = sbr.rel (%p135) target = $region20
      $region19: #{wrapped_gnn_forward.5} parent=11 // pred_region
        _
      $region20: #{wrapped_gnn_forward.5} parent=11 // pred_fallthru
        _
    $region12: #{wrapped_gnn_forward.5} parent=5 // pred_fallthru
      _
    %p138 = scmp.lt.s32.totalorder %s9, 2
    // Predicated region
    $region21: #{wrapped_gnn_forward.5} parent=5 // pred_check
      %p139 = pneg %p138
    $region22: #{wrapped_gnn_forward.5} parent=5 // pred_check_branch
      %141 = sbr.rel (%p139) target = $region24
    $region23: #{wrapped_gnn_forward.5} parent=5 // pred_region
      // Predicated region
      $region25: #{wrapped_gnn_forward.5} parent=23 // pred_check
        %p142 = pneg %p43
      $region26: #{wrapped_gnn_forward.5} parent=23 // pred_check_branch
        %144 = sbr.rel (%p142) target = $region28
      $region27: #{wrapped_gnn_forward.5} parent=23 // pred_region
        %s145 = smul.u32 16, %s16
        %s146 = smul.u32 2, %s17
        %p147 = scmp.lt.s32.totalorder %s145, 31
        %s148 = scalar_select %p147, %s145, 31
        %p149 = scmp.lt.s32.totalorder %s146, 1
        %s150 = scalar_select %p149, %s146, 1
        %s151 = smul.addr %s148, 2
        %s152 = sadd.s32 %s150, %s151
        %s153 = smul.addr %s152, 8
        %s154 = scalar_lea.vmem %s0, %s153
        %s155 = smul.u32 16, %s16
        %s156 = smul.u32 2, %s17
      $region28: #{wrapped_gnn_forward.5} parent=23 // pred_fallthru
        _
    $region24: #{wrapped_gnn_forward.5} parent=5 // pred_fallthru
      _
    %p157 = scmp.le.s32.totalorder 1, %s9
    %p158 = scmp.lt.s32.totalorder %s9, 3
    %p159 = pnand %p157, %p158
    %p160 = pneg %p159
    // Predicated region
    $region29: #{wrapped_gnn_forward.5} parent=5 // pred_check
      _
    $region30: #{wrapped_gnn_forward.5} parent=5 // pred_check_branch
      %162 = sbr.rel (%p159) target = $region32
    $region31: #{wrapped_gnn_forward.5} parent=5 // pred_region
      %s163 = ssub.s32 %s9, 1
      %s164 = smul.u32 16, %s18
      %s165 = smul.u32 2, %s19
      %p166 = scmp.lt.s32.totalorder %s164, 31
      %s167 = scalar_select %p166, %s164, 31
      %p168 = scmp.lt.s32.totalorder %s165, 1
      %s169 = scalar_select %p168, %s165, 1
      %s170 = smul.addr %s167, 2
      %s171 = sadd.s32 %s169, %s170
      %s172 = smul.addr %s171, 8
      %s173 = scalar_lea.vmem %s0, %s172
      %p174 = pneg %p49
      %p175 = pneg %p46
      %p176 = pneg %p70
      %p177 = pneg %p67
      %p178 = pneg %p91
      %p179 = pneg %p88
      %p180 = pneg %p117
      %p181 = pneg %p114
      %s182 = smul.u32 16, %s18
      %p183 = scmp.lt.s32.totalorder %s182, 31
      %s184 = scalar_select %p183, %s182, 31
      %s185 = smul.addr %s184, 4
      %s186 = scalar_lea.vmem %s3, %s185
      %s187 = smul.u32 16, %s18
      %s188 = smul.u32 2, %s19
      %p189 = scmp.lt.s32.totalorder %s187, 31
      %s190 = scalar_select %p189, %s187, 31
      %p191 = scmp.lt.s32.totalorder %s188, 1
      %s192 = scalar_select %p191, %s188, 1
      %s193 = smul.addr %s190, 2
      %s194 = sadd.s32 %s192, %s193
      %s195 = smul.addr %s194, 8
      %s196 = scalar_lea.vmem %s0, %s195
      %s197 = smul.u32 16, %s18
      %s198 = smul.u32 2, %s19
      %s199 = smul.u32 16, %s18
      %p200 = scmp.lt.s32.totalorder %s199, 31
      %s201 = scalar_select %p200, %s199, 31
      %s202 = smul.addr %s201, 4
      %s203 = scalar_lea.vmem %s3, %s202
      %s204 = smul.u32 16, %s18
      %p206 = scmp.eq.s32.totalorder %s19, 0
      // Predicated region
      $region33: #{wrapped_gnn_forward.5} parent=31 // pred_check
        %p207 = pneg %p206
      $region34: #{wrapped_gnn_forward.5} parent=31 // pred_check_branch
        %209 = sbr.rel (%p207) target = $region36
      $region35: #{wrapped_gnn_forward.5} parent=31 // pred_region
        %210 = vst [vmem:[#allocation2] sm:$0xff] 0.0
        %211 = vst [vmem:[#allocation2 + $0x8] sm:$0xff] 0.0
        %212 = vst [vmem:[#allocation2 + $0x10] sm:$0xff] 0.0
        %213 = vst [vmem:[#allocation2 + $0x18] sm:$0xff] 0.0
        %214 = vst [vmem:[#allocation2 + $0x20] sm:$0xff] 0.0
        %215 = vst [vmem:[#allocation2 + $0x28] sm:$0xff] 0.0
        %216 = vst [vmem:[#allocation2 + $0x30] sm:$0xff] 0.0
        %217 = vst [vmem:[#allocation2 + $0x38] sm:$0xff] 0.0
        %218 = vst [vmem:[#allocation2 + $0x40] sm:$0xff] 0.0
        %219 = vst [vmem:[#allocation2 + $0x48] sm:$0xff] 0.0
        %220 = vst [vmem:[#allocation2 + $0x50] sm:$0xff] 0.0
        %221 = vst [vmem:[#allocation2 + $0x58] sm:$0xff] 0.0
        %222 = vst [vmem:[#allocation2 + $0x60] sm:$0xff] 0.0
        %223 = vst [vmem:[#allocation2 + $0x68] sm:$0xff] 0.0
        %224 = vst [vmem:[#allocation2 + $0x70] sm:$0xff] 0.0
        %225 = vst [vmem:[#allocation2 + $0x78] sm:$0xff] 0.0
      $region36: #{wrapped_gnn_forward.5} parent=31 // pred_fallthru
        _
      %v226 = vld [vmem:[%s196] sm:$0xff]
      %v227 = vld [vmem:[%s196 + $0x8] sm:$0xff]
      %v228 = vld [vmem:[%s196 + $0x10] sm:$0xff]
      %v229 = vld [vmem:[%s196 + $0x18] sm:$0xff]
      %v230 = vld [vmem:[%s196 + $0x20] sm:$0xff]
      %v231 = vld [vmem:[%s196 + $0x28] sm:$0xff]
      %v232 = vld [vmem:[%s196 + $0x30] sm:$0xff]
      %v233 = vld [vmem:[%s196 + $0x38] sm:$0xff]
      %v234 = vld [vmem:[%s196 + $0x40] sm:$0xff]
      %v235 = vld [vmem:[%s196 + $0x48] sm:$0xff]
      %v236 = vld [vmem:[%s196 + $0x50] sm:$0xff]
      %v237 = vld [vmem:[%s196 + $0x58] sm:$0xff]
      %v238 = vld [vmem:[%s196 + $0x60] sm:$0xff]
      %v239 = vld [vmem:[%s196 + $0x68] sm:$0xff]
      %v240 = vld [vmem:[%s196 + $0x70] sm:$0xff]
      %v241 = vld [vmem:[%s196 + $0x78] sm:$0xff]
      %v242 = vld [vmem:[%s196 + $0x80] sm:$0xff]
      %v243 = vld [vmem:[%s196 + $0x88] sm:$0xff]
      %v244 = vld [vmem:[%s196 + $0x90] sm:$0xff]
      %v245 = vld [vmem:[%s196 + $0x98] sm:$0xff]
      %v246 = vld [vmem:[%s196 + $0xa0] sm:$0xff]
      %v247 = vld [vmem:[%s196 + $0xa8] sm:$0xff]
      %v248 = vld [vmem:[%s196 + $0xb0] sm:$0xff]
      %v249 = vld [vmem:[%s196 + $0xb8] sm:$0xff]
      %v250 = vld [vmem:[%s196 + $0xc0] sm:$0xff]
      %v251 = vld [vmem:[%s196 + $0xc8] sm:$0xff]
      %v252 = vld [vmem:[%s196 + $0xd0] sm:$0xff]
      %v253 = vld [vmem:[%s196 + $0xd8] sm:$0xff]
      %v254 = vld [vmem:[%s196 + $0xe0] sm:$0xff]
      %v255 = vld [vmem:[%s196 + $0xe8] sm:$0xff]
      %v256 = vld [vmem:[%s196 + $0xf0] sm:$0xff]
      %v257 = vld [vmem:[%s196 + $0xf8] sm:$0xff]
      %v258 = vpack.c.bf16 %v228, %v226
      %v259 = vpack.c.bf16 %v229, %v227
      %v260 = vpack.c.bf16 %v232, %v230
      %v261 = vpack.c.bf16 %v233, %v231
      %v262 = vpack.c.bf16 %v236, %v234
      %v263 = vpack.c.bf16 %v237, %v235
      %v264 = vpack.c.bf16 %v240, %v238
      %v265 = vpack.c.bf16 %v241, %v239
      %v266 = vpack.c.bf16 %v244, %v242
      %v267 = vpack.c.bf16 %v245, %v243
      %v268 = vpack.c.bf16 %v248, %v246
      %v269 = vpack.c.bf16 %v249, %v247
      %v270 = vpack.c.bf16 %v252, %v250
      %v271 = vpack.c.bf16 %v253, %v251
      %v272 = vpack.c.bf16 %v256, %v254
      %v273 = vpack.c.bf16 %v257, %v255
      %s274 = smul.u32 %s19, 256
      %s275 = sshra.s32 %s274, 3
      %s276 = sand.u32 %s274, 7
      %s277 = smul.addr %s275, 4
      %s278 = scalar_lea.vmem %s1, %s277
      %v279 = vld [vmem:[%s278] sm:$0xf]
      %v280 = vld [vmem:[%s278 + $0x4] sm:$0xf]
      %v281 = vld [vmem:[%s278 + $0x8] sm:$0xf]
      %v282 = vld [vmem:[%s278 + $0xc] sm:$0xf]
      %v283 = vld [vmem:[%s278 + $0x10] sm:$0xf]
      %v284 = vld [vmem:[%s278 + $0x14] sm:$0xf]
      %v285 = vld [vmem:[%s278 + $0x18] sm:$0xf]
      %v286 = vld [vmem:[%s278 + $0x1c] sm:$0xf]
      %v287 = vld [vmem:[%s278 + $0x20] sm:$0xf]
      %v288 = vld [vmem:[%s278 + $0x24] sm:$0xf]
      %v289 = vld [vmem:[%s278 + $0x28] sm:$0xf]
      %v290 = vld [vmem:[%s278 + $0x2c] sm:$0xf]
      %v291 = vld [vmem:[%s278 + $0x30] sm:$0xf]
      %v292 = vld [vmem:[%s278 + $0x34] sm:$0xf]
      %v293 = vld [vmem:[%s278 + $0x38] sm:$0xf]
      %v294 = vld [vmem:[%s278 + $0x3c] sm:$0xf]
      %v295 = vld [vmem:[%s278 + $0x40] sm:$0xf]
      %v296 = vld [vmem:[%s278 + $0x44] sm:$0xf]
      %v297 = vld [vmem:[%s278 + $0x48] sm:$0xf]
      %v298 = vld [vmem:[%s278 + $0x4c] sm:$0xf]
      %v299 = vld [vmem:[%s278 + $0x50] sm:$0xf]
      %v300 = vld [vmem:[%s278 + $0x54] sm:$0xf]
      %v301 = vld [vmem:[%s278 + $0x58] sm:$0xf]
      %v302 = vld [vmem:[%s278 + $0x5c] sm:$0xf]
      %v303 = vld [vmem:[%s278 + $0x60] sm:$0xf]
      %v304 = vld [vmem:[%s278 + $0x64] sm:$0xf]
      %v305 = vld [vmem:[%s278 + $0x68] sm:$0xf]
      %v306 = vld [vmem:[%s278 + $0x6c] sm:$0xf]
      %v307 = vld [vmem:[%s278 + $0x70] sm:$0xf]
      %v308 = vld [vmem:[%s278 + $0x74] sm:$0xf]
      %v309 = vld [vmem:[%s278 + $0x78] sm:$0xf]
      %v310 = vld [vmem:[%s278 + $0x7c] sm:$0xf]
      %v311 = vld [vmem:[#allocation2] sm:$0xff]
      %v312 = vld [vmem:[#allocation2 + $0x8] sm:$0xff]
      %v313 = vld [vmem:[#allocation2 + $0x10] sm:$0xff]
      %v314 = vld [vmem:[#allocation2 + $0x18] sm:$0xff]
      %v315 = vld [vmem:[#allocation2 + $0x20] sm:$0xff]
      %v316 = vld [vmem:[#allocation2 + $0x28] sm:$0xff]
      %v317 = vld [vmem:[#allocation2 + $0x30] sm:$0xff]
      %v318 = vld [vmem:[#allocation2 + $0x38] sm:$0xff]
      %v319 = vld [vmem:[#allocation2 + $0x40] sm:$0xff]
      %v320 = vld [vmem:[#allocation2 + $0x48] sm:$0xff]
      %v321 = vld [vmem:[#allocation2 + $0x50] sm:$0xff]
      %v322 = vld [vmem:[#allocation2 + $0x58] sm:$0xff]
      %v323 = vld [vmem:[#allocation2 + $0x60] sm:$0xff]
      %v324 = vld [vmem:[#allocation2 + $0x68] sm:$0xff]
      %v325 = vld [vmem:[#allocation2 + $0x70] sm:$0xff]
      %v326 = vld [vmem:[#allocation2 + $0x78] sm:$0xff]
      %v359 = vunpack.c.l.b16 %v279
      %v360 = vunpack.c.l.b16 %v280
      %v361 = vunpack.c.l.b16 %v281
      %v362 = vunpack.c.l.b16 %v282
      %v363 = vunpack.c.l.b16 %v283
      %v364 = vunpack.c.l.b16 %v284
      %v365 = vunpack.c.l.b16 %v285
      %v366 = vunpack.c.l.b16 %v286
      %v367 = vunpack.c.l.b16 %v287
      %v368 = vunpack.c.l.b16 %v288
      %v369 = vunpack.c.l.b16 %v289
      %v370 = vunpack.c.l.b16 %v290
      %v371 = vunpack.c.l.b16 %v291
      %v372 = vunpack.c.l.b16 %v292
      %v373 = vunpack.c.l.b16 %v293
      %v374 = vunpack.c.l.b16 %v294
      %v375 = vunpack.c.l.b16 %v295
      %v376 = vunpack.c.l.b16 %v296
      %v377 = vunpack.c.l.b16 %v297
      %v378 = vunpack.c.l.b16 %v298
      %v379 = vunpack.c.l.b16 %v299
      %v380 = vunpack.c.l.b16 %v300
      %v381 = vunpack.c.l.b16 %v301
      %v382 = vunpack.c.l.b16 %v302
      %v383 = vunpack.c.l.b16 %v303
      %v384 = vunpack.c.l.b16 %v304
      %v385 = vunpack.c.l.b16 %v305
      %v386 = vunpack.c.l.b16 %v306
      %v387 = vunpack.c.l.b16 %v307
      %v388 = vunpack.c.l.b16 %v308
      %v389 = vunpack.c.l.b16 %v309
      %v390 = vunpack.c.l.b16 %v310
      %v391 = vpack.c.b16 %v360, %v359
      %v392 = vpack.c.b16 %v362, %v361
      %v393 = vpack.c.b16 %v364, %v363
      %v394 = vpack.c.b16 %v366, %v365
      %v395 = vpack.c.b16 %v368, %v367
      %v396 = vpack.c.b16 %v370, %v369
      %v397 = vpack.c.b16 %v372, %v371
      %v398 = vpack.c.b16 %v374, %v373
      %v399 = vpack.c.b16 %v376, %v375
      %v400 = vpack.c.b16 %v378, %v377
      %v401 = vpack.c.b16 %v380, %v379
      %v402 = vpack.c.b16 %v382, %v381
      %v403 = vpack.c.b16 %v384, %v383
      %v404 = vpack.c.b16 %v386, %v385
      %v405 = vpack.c.b16 %v388, %v387
      %v406 = vpack.c.b16 %v390, %v389
      %423 = vmatprep.subr.bf16.mxu0 0
      %424 = vmatpush1.bf16.msra.mxu0 %v391
      %425 = vmatprep.subr.bf16.mxu0 0
      %426 = vmatpush1.bf16.msra.mxu0 %v392
      %427 = vmatprep.subr.bf16.mxu0 0
      %428 = vmatpush1.bf16.msra.mxu0 %v393
      %429 = vmatprep.subr.bf16.mxu0 0
      %430 = vmatpush1.bf16.msra.mxu0 %v394
      %431 = vmatprep.subr.bf16.mxu0 0
      %432 = vmatpush1.bf16.msra.mxu0 %v395
      %433 = vmatprep.subr.bf16.mxu0 0
      %434 = vmatpush1.bf16.msra.mxu0 %v396
      %435 = vmatprep.subr.bf16.mxu0 0
      %436 = vmatpush1.bf16.msra.mxu0 %v397
      %437 = vmatprep.subr.bf16.mxu0 0
      %438 = vmatpush1.bf16.msra.mxu0 %v398
      %439 = vmatprep.subr.bf16.mxu0 0
      %440 = vmatpush1.bf16.msra.mxu0 %v399
      %441 = vmatprep.subr.bf16.mxu0 0
      %442 = vmatpush1.bf16.msra.mxu0 %v400
      %443 = vmatprep.subr.bf16.mxu0 0
      %444 = vmatpush1.bf16.msra.mxu0 %v401
      %445 = vmatprep.subr.bf16.mxu0 0
      %446 = vmatpush1.bf16.msra.mxu0 %v402
      %447 = vmatprep.subr.bf16.mxu0 0
      %448 = vmatpush1.bf16.msra.mxu0 %v403
      %449 = vmatprep.subr.bf16.mxu0 0
      %450 = vmatpush1.bf16.msra.mxu0 %v404
      %451 = vmatprep.subr.bf16.mxu0 0
      %452 = vmatpush1.bf16.msra.mxu0 %v405
      %453 = vmatprep.subr.bf16.mxu0 0
      %454 = vmatpush1.bf16.msra.mxu0 %v406
      %455 = vmatprep.mubr.bf16.mxu0 %v259
      %456 = vmatmul.mubr.bf16.gmra.mrb[0].mxu0 %v258
      %v457 = vpop.f32.mrb[0].mxu0
      %v458 = vadd.f32 0.0, %v457
      %v459 = vpop.f32.mrb[0].mxu0
      %v460 = vpop.f32.mrb[0].mxu0
      %v461 = vadd.f32 0.0, %v460
      %v462 = vpop.f32.mrb[0].mxu0
      %463 = vmatprep.mubr.bf16.mxu0 %v261
      %464 = vmatmul.mubr.bf16.gmra.mrb[0].mxu0 %v260
      %v465 = vpop.f32.mrb[0].mxu0
      %v466 = vadd.f32 0.0, %v465
      %v467 = vpop.f32.mrb[0].mxu0
      %v468 = vpop.f32.mrb[0].mxu0
      %v469 = vadd.f32 0.0, %v468
      %v470 = vpop.f32.mrb[0].mxu0
      %471 = vmatprep.mubr.bf16.mxu0 %v263
      %472 = vmatmul.mubr.bf16.gmra.mrb[0].mxu0 %v262
      %v473 = vpop.f32.mrb[0].mxu0
      %v474 = vadd.f32 0.0, %v473
      %v475 = vpop.f32.mrb[0].mxu0
      %v476 = vpop.f32.mrb[0].mxu0
      %v477 = vadd.f32 0.0, %v476
      %v478 = vpop.f32.mrb[0].mxu0
      %479 = vmatprep.mubr.bf16.mxu0 %v265
      %480 = vmatmul.mubr.bf16.gmra.mrb[0].mxu0 %v264
      %v481 = vpop.f32.mrb[0].mxu0
      %v482 = vadd.f32 0.0, %v481
      %v483 = vpop.f32.mrb[0].mxu0
      %v484 = vpop.f32.mrb[0].mxu0
      %v485 = vadd.f32 0.0, %v484
      %v486 = vpop.f32.mrb[0].mxu0
      %487 = vmatprep.mubr.bf16.mxu0 %v267
      %488 = vmatmul.mubr.bf16.gmra.mrb[0].mxu0 %v266
      %v489 = vpop.f32.mrb[0].mxu0
      %v490 = vadd.f32 0.0, %v489
      %v491 = vpop.f32.mrb[0].mxu0
      %v492 = vpop.f32.mrb[0].mxu0
      %v493 = vadd.f32 0.0, %v492
      %v494 = vpop.f32.mrb[0].mxu0
      %495 = vmatprep.mubr.bf16.mxu0 %v269
      %496 = vmatmul.mubr.bf16.gmra.mrb[0].mxu0 %v268
      %v497 = vpop.f32.mrb[0].mxu0
      %v498 = vadd.f32 0.0, %v497
      %v499 = vpop.f32.mrb[0].mxu0
      %v500 = vpop.f32.mrb[0].mxu0
      %v501 = vadd.f32 0.0, %v500
      %v502 = vpop.f32.mrb[0].mxu0
      %503 = vmatprep.mubr.bf16.mxu0 %v271
      %504 = vmatmul.mubr.bf16.gmra.mrb[0].mxu0 %v270
      %v505 = vpop.f32.mrb[0].mxu0
      %v506 = vadd.f32 0.0, %v505
      %v507 = vpop.f32.mrb[0].mxu0
      %v508 = vpop.f32.mrb[0].mxu0
      %v509 = vadd.f32 0.0, %v508
      %v510 = vpop.f32.mrb[0].mxu0
      %511 = vmatprep.mubr.bf16.mxu0 %v273
      %512 = vmatmul.mubr.bf16.gmra.mrb[0].mxu0 %v272
      %v513 = vpop.f32.mrb[0].mxu0
      %v514 = vadd.f32 0.0, %v513
      %v515 = vpop.f32.mrb[0].mxu0
      %v516 = vpop.f32.mrb[0].mxu0
      %v517 = vadd.f32 0.0, %v516
      %v518 = vpop.f32.mrb[0].mxu0
      %519 = vdwg.mxu0
      %v520 = vadd.f32 %v311, %v458
      %v521 = vadd.f32 %v312, %v461
      %v522 = vadd.f32 %v313, %v466
      %v523 = vadd.f32 %v314, %v469
      %v524 = vadd.f32 %v315, %v474
      %v525 = vadd.f32 %v316, %v477
      %v526 = vadd.f32 %v317, %v482
      %v527 = vadd.f32 %v318, %v485
      %v528 = vadd.f32 %v319, %v490
      %v529 = vadd.f32 %v320, %v493
      %v530 = vadd.f32 %v321, %v498
      %v531 = vadd.f32 %v322, %v501
      %v532 = vadd.f32 %v323, %v506
      %v533 = vadd.f32 %v324, %v509
      %v534 = vadd.f32 %v325, %v514
      %v535 = vadd.f32 %v326, %v517
      %536 = vst [vmem:[#allocation2] sm:$0xff] %v520
      %537 = vst [vmem:[#allocation2 + $0x8] sm:$0xff] %v521
      %538 = vst [vmem:[#allocation2 + $0x10] sm:$0xff] %v522
      %539 = vst [vmem:[#allocation2 + $0x18] sm:$0xff] %v523
      %540 = vst [vmem:[#allocation2 + $0x20] sm:$0xff] %v524
      %541 = vst [vmem:[#allocation2 + $0x28] sm:$0xff] %v525
      %542 = vst [vmem:[#allocation2 + $0x30] sm:$0xff] %v526
      %543 = vst [vmem:[#allocation2 + $0x38] sm:$0xff] %v527
      %544 = vst [vmem:[#allocation2 + $0x40] sm:$0xff] %v528
      %545 = vst [vmem:[#allocation2 + $0x48] sm:$0xff] %v529
      %546 = vst [vmem:[#allocation2 + $0x50] sm:$0xff] %v530
      %547 = vst [vmem:[#allocation2 + $0x58] sm:$0xff] %v531
      %548 = vst [vmem:[#allocation2 + $0x60] sm:$0xff] %v532
      %549 = vst [vmem:[#allocation2 + $0x68] sm:$0xff] %v533
      %550 = vst [vmem:[#allocation2 + $0x70] sm:$0xff] %v534
      %551 = vst [vmem:[#allocation2 + $0x78] sm:$0xff] %v535
      // Predicated region
      $region37: #{wrapped_gnn_forward.5} parent=31 // pred_check
        %p552 = pneg %p206
      $region38: #{wrapped_gnn_forward.5} parent=31 // pred_check_branch
        %554 = sbr.rel (%p552) target = $region40
      $region39: #{wrapped_gnn_forward.5} parent=31 // pred_region
        %v555 = vld [vmem:[#allocation2] sm:$0xff]
        %v556 = vld [vmem:[#allocation2 + $0x8] sm:$0xff]
        %v557 = vld [vmem:[#allocation2 + $0x10] sm:$0xff]
        %v558 = vld [vmem:[#allocation2 + $0x18] sm:$0xff]
        %v559 = vld [vmem:[#allocation2 + $0x20] sm:$0xff]
        %v560 = vld [vmem:[#allocation2 + $0x28] sm:$0xff]
        %v561 = vld [vmem:[#allocation2 + $0x30] sm:$0xff]
        %v562 = vld [vmem:[#allocation2 + $0x38] sm:$0xff]
        %v563 = vld [vmem:[#allocation2 + $0x40] sm:$0xff]
        %v564 = vld [vmem:[#allocation2 + $0x48] sm:$0xff]
        %v565 = vld [vmem:[#allocation2 + $0x50] sm:$0xff]
        %v566 = vld [vmem:[#allocation2 + $0x58] sm:$0xff]
        %v567 = vld [vmem:[#allocation2 + $0x60] sm:$0xff]
        %v568 = vld [vmem:[#allocation2 + $0x68] sm:$0xff]
        %v569 = vld [vmem:[#allocation2 + $0x70] sm:$0xff]
        %v570 = vld [vmem:[#allocation2 + $0x78] sm:$0xff]
        %v571 = vld [vmem:[%s2] sm:$0x1]
        %v573 = vlaneseq
        %v574 = vshrl.u32 %v573, 7
        %v575 = vsub.s32 0, %v574
        %v576 = vrot.slane %v571, %v575
        %v578 = vadd.f32 %v555, %v576
        %v579 = vadd.f32 %v556, %v576
        %v580 = vadd.f32 %v557, %v576
        %v581 = vadd.f32 %v558, %v576
        %v582 = vadd.f32 %v559, %v576
        %v583 = vadd.f32 %v560, %v576
        %v584 = vadd.f32 %v561, %v576
        %v585 = vadd.f32 %v562, %v576
        %v586 = vadd.f32 %v563, %v576
        %v587 = vadd.f32 %v564, %v576
        %v588 = vadd.f32 %v565, %v576
        %v589 = vadd.f32 %v566, %v576
        %v590 = vadd.f32 %v567, %v576
        %v591 = vadd.f32 %v568, %v576
        %v592 = vadd.f32 %v569, %v576
        %v593 = vadd.f32 %v570, %v576
        %v594 = vmax.f32 %v578, 0.0
        %v595 = vmax.f32 %v579, 0.0
        %v596 = vmax.f32 %v580, 0.0
        %v597 = vmax.f32 %v581, 0.0
        %v598 = vmax.f32 %v582, 0.0
        %v599 = vmax.f32 %v583, 0.0
        %v600 = vmax.f32 %v584, 0.0
        %v601 = vmax.f32 %v585, 0.0
        %v602 = vmax.f32 %v586, 0.0
        %v603 = vmax.f32 %v587, 0.0
        %v604 = vmax.f32 %v588, 0.0
        %v605 = vmax.f32 %v589, 0.0
        %v606 = vmax.f32 %v590, 0.0
        %v607 = vmax.f32 %v591, 0.0
        %v608 = vmax.f32 %v592, 0.0
        %v609 = vmax.f32 %v593, 0.0
        %v610 = vpack.c.bf16 %v595, %v594
        %v611 = vpack.c.bf16 %v597, %v596
        %v612 = vpack.c.bf16 %v599, %v598
        %v613 = vpack.c.bf16 %v601, %v600
        %v614 = vpack.c.bf16 %v603, %v602
        %v615 = vpack.c.bf16 %v605, %v604
        %v616 = vpack.c.bf16 %v607, %v606
        %v617 = vpack.c.bf16 %v609, %v608
        %v626 = vunpack.c.l.b16 %v610
        %v627 = vunpack.c.h.b16 %v610
        %v628 = vunpack.c.l.b16 %v611
        %v629 = vunpack.c.h.b16 %v611
        %v630 = vunpack.c.l.b16 %v612
        %v631 = vunpack.c.h.b16 %v612
        %v632 = vunpack.c.l.b16 %v613
        %v633 = vunpack.c.h.b16 %v613
        %v634 = vunpack.c.l.b16 %v614
        %v635 = vunpack.c.h.b16 %v614
        %v636 = vunpack.c.l.b16 %v615
        %v637 = vunpack.c.h.b16 %v615
        %v638 = vunpack.c.l.b16 %v616
        %v639 = vunpack.c.h.b16 %v616
        %v640 = vunpack.c.l.b16 %v617
        %v641 = vunpack.c.h.b16 %v617
        %v642 = vpack.c.b16 %v626, %v626
        %v643 = vpack.c.b16 %v627, %v627
        %v644 = vpack.c.b16 %v628, %v628
        %v645 = vpack.c.b16 %v629, %v629
        %v646 = vpack.c.b16 %v630, %v630
        %v647 = vpack.c.b16 %v631, %v631
        %v648 = vpack.c.b16 %v632, %v632
        %v649 = vpack.c.b16 %v633, %v633
        %v650 = vpack.c.b16 %v634, %v634
        %v651 = vpack.c.b16 %v635, %v635
        %v652 = vpack.c.b16 %v636, %v636
        %v653 = vpack.c.b16 %v637, %v637
        %v654 = vpack.c.b16 %v638, %v638
        %v655 = vpack.c.b16 %v639, %v639
        %v656 = vpack.c.b16 %v640, %v640
        %v657 = vpack.c.b16 %v641, %v641
        %674 = vst [vmem:[%s203] sm:$0xf] %v642
        %675 = vst [vmem:[%s203 + $0x4] sm:$0xf] %v643
        %676 = vst [vmem:[%s203 + $0x8] sm:$0xf] %v644
        %677 = vst [vmem:[%s203 + $0xc] sm:$0xf] %v645
        %678 = vst [vmem:[%s203 + $0x10] sm:$0xf] %v646
        %679 = vst [vmem:[%s203 + $0x14] sm:$0xf] %v647
        %680 = vst [vmem:[%s203 + $0x18] sm:$0xf] %v648
        %681 = vst [vmem:[%s203 + $0x1c] sm:$0xf] %v649
        %682 = vst [vmem:[%s203 + $0x20] sm:$0xf] %v650
        %683 = vst [vmem:[%s203 + $0x24] sm:$0xf] %v651
        %684 = vst [vmem:[%s203 + $0x28] sm:$0xf] %v652
        %685 = vst [vmem:[%s203 + $0x2c] sm:$0xf] %v653
        %686 = vst [vmem:[%s203 + $0x30] sm:$0xf] %v654
        %687 = vst [vmem:[%s203 + $0x34] sm:$0xf] %v655
        %688 = vst [vmem:[%s203 + $0x38] sm:$0xf] %v656
        %689 = vst [vmem:[%s203 + $0x3c] sm:$0xf] %v657
      $region40: #{wrapped_gnn_forward.5} parent=31 // pred_fallthru
        _
      %s690 = smul.u32 16, %s18
      %p691 = scmp.lt.s32.totalorder %s690, 31
      %s692 = scalar_select %p691, %s690, 31
      %s693 = smul.addr %s692, 4
      %s694 = scalar_lea.vmem %s3, %s693
      // Predicated region
      $region41: #{wrapped_gnn_forward.5} parent=31 // pred_check
        %p695 = pneg %p114
      $region42: #{wrapped_gnn_forward.5} parent=31 // pred_check_branch
        %697 = sbr.rel (%p695) target = $region44
      $region43: #{wrapped_gnn_forward.5} parent=31 // pred_region
        %s698 = smul.u32 16, %s18
      $region44: #{wrapped_gnn_forward.5} parent=31 // pred_fallthru
        _
    $region32: #{wrapped_gnn_forward.5} parent=5 // pred_fallthru
      _
    %p699 = scmp.le.s32.totalorder 2, %s9
    // Predicated region
    $region45: #{wrapped_gnn_forward.5} parent=5 // pred_check
      %p700 = pneg %p699
    $region46: #{wrapped_gnn_forward.5} parent=5 // pred_check_branch
      %702 = sbr.rel (%p700) target = $region48
    $region47: #{wrapped_gnn_forward.5} parent=5 // pred_region
      %s703 = ssub.s32 %s9, 2
      // Predicated region
      $region49: #{wrapped_gnn_forward.5} parent=47 // pred_check
        %p704 = pneg %p120
      $region50: #{wrapped_gnn_forward.5} parent=47 // pred_check_branch
        %706 = sbr.rel (%p704) target = $region52
      $region51: #{wrapped_gnn_forward.5} parent=47 // pred_region
        %s707 = smul.u32 16, %s20
        %p708 = scmp.lt.s32.totalorder %s707, 31
        %s709 = scalar_select %p708, %s707, 31
        %s710 = smul.addr %s709, 4
        %s711 = scalar_lea.vmem %s3, %s710
      $region52: #{wrapped_gnn_forward.5} parent=47 // pred_fallthru
        _
    $region48: #{wrapped_gnn_forward.5} parent=5 // pred_fallthru
      _
  $region6: #{wrapped_gnn_forward.5} parent=0 // loop_footer
    %s13 = sadd.s32 1, %s9
  $region7: #{wrapped_gnn_forward.5} parent=0 // loop_footer_branch
    %8 = sbr.rel target = $region3
  $region8: #{wrapped_gnn_forward.5} parent=0 // loop_exit
    _

</llo_original>
